<compile_context>
chip_gen: v6e
topology: v6e:2x2x1
jax: 0.10.0
libtpu: 0.0.40
codegen_flags: <defaults>
</compile_context>

<pallas_src>
import functools

import jax
import jax.numpy as jnp
from jax import lax
from jax.experimental import pallas as pl
from jax.experimental.pallas import tpu as pltpu


def _round_up(x, m):
    return ((x + m - 1) // m) * m


# ----------------------------------------------------------------------------- kernel
def _classifier_kernel(x_ref, mask_ref,
                       dw1_ref, b1a_ref, pw1_ref, b1b_ref,
                       dw2_ref, b2a_ref, pw2_ref, b2b_ref,
                       cw_ref, cb_ref,
                       out_ref,
                       x_scr, y_scr,
                       *, W4, N4, NF, PADF, NEXT):
    f32 = jnp.float32

    # Hoist the tiny parameters into registers once.  BatchNorm scales are
    # already folded into dw*/pw* on the host, so each stage's epilogue is
    # just a broadcast add + ReLU (no full-width multiply).
    dw1, dw2 = dw1_ref[...], dw2_ref[...]            # (C, 9)
    b1a, b1b = b1a_ref[...], b1b_ref[...]            # (C, 1)
    b2a, b2b = b2a_ref[...], b2b_ref[...]            # (C, 1)
    pw1, pw2 = pw1_ref[...], pw2_ref[...]            # (C, C)
    cw, cb = cw_ref[...], cb_ref[...]                # (NCLS, C), (NCLS, 1)
    mask = mask_ref[...]                             # (1, NF)

    # Zero halos never change across grid steps: write them once (batch axis is
    # therefore "arbitrary" -- see wrapper).  Per step only the interiors are
    # rewritten.
    @pl.when(pl.program_id(0) == 0)
    def _():
        x_scr[...] = jnp.zeros_like(x_scr)
        y_scr[...] = jnp.zeros_like(y_scr)

    # Stage this image's flattened (H+4)x(W+4) padded grid into the halo'd
    # scratch.  PADF is lane-tile aligned, so only the tail tile of this store
    # is masked.
    x_scr[:, PADF:PADF + N4] = x_ref[0]

    def depthwise3x3(src_ref, dw, shift):
        # 9 taps = 9 statically shifted lane windows sliced straight from the
        # VMEM ref (no materialized (C, NEXT) value); accumulator is seeded
        # with the first tap's product instead of adding into zeros.
        off0 = PADF - W4 - 1                          # (ky, kx) = (-1, -1)
        acc = src_ref[:, off0:off0 + NF] * dw[:, 0:1]
        for k in range(1, 9):
            ky, kx = divmod(k, 3)
            off = PADF + (ky - 1) * W4 + (kx - 1)
            acc = acc + src_ref[:, off:off + NF] * dw[:, k:k + 1]
        return jnp.maximum(acc + shift, 0.0)          # folded BN: add + ReLU

    # ---- _DSConv #1 (evaluated over the whole padded grid; ring discarded) --
    t = depthwise3x3(x_scr, dw1, b1a)                               # (C, NF)
    t = jnp.maximum(jnp.dot(pw1, t, preferred_element_type=f32) + b1b, 0.0)
    # Zero everything outside the true HxW interior: that ring of zeros is
    # exactly the zero padding the second depthwise conv needs (INVARIANT:
    # ring/tail lanes are never consumed downstream except as zero padding).
    t = t * mask

    # Interior store only; halos stay zero from the one-time init.
    y_scr[:, PADF:PADF + NF] = t

    # ---- _DSConv #2 ----------------------------------------------------------
    z = depthwise3x3(y_scr, dw2, b2a)
    z = jnp.maximum(jnp.dot(pw2, z, preferred_element_type=f32) + b2b, 0.0)

    # ---- head: Dropout(0.1) is identity at inference; 1x1 conv + bias (MXU) --
    # TODO(synk): training-mode dropout (p=0.1) not implemented (inference only).
    out_ref[0] = jnp.dot(cw, z, preferred_element_type=f32) + cb


# ----------------------------------------------------------------------------- params
def init_params(key, C, NCLS):
    ks = jax.random.split(key, 10)

    def n(k, shape, scale):
        return (scale * jax.random.normal(k, shape)).astype(jnp.float32)

    def bn(k):
        k1, k2, k3, k4 = jax.random.split(k, 4)
        gamma = (1.0 + 0.1 * jax.random.normal(k1, (C,))).astype(jnp.float32)
        beta = (0.1 * jax.random.normal(k2, (C,))).astype(jnp.float32)
        mean = (0.1 * jax.random.normal(k3, (C,))).astype(jnp.float32)
        var = (0.5 + jax.random.uniform(k4, (C,))).astype(jnp.float32)
        return (gamma, beta, mean, var)

    return {
        "dw1_w": n(ks[0], (C, 1, 3, 3), 0.3),   # depthwise 3x3, groups=C
        "bn1a": bn(ks[1]),
        "pw1_w": n(ks[2], (C, C, 1, 1), 0.3),   # pointwise 1x1, no bias
        "bn1b": bn(ks[3]),
        "dw2_w": n(ks[4], (C, 1, 3, 3), 0.3),
        "bn2a": bn(ks[5]),
        "pw2_w": n(ks[6], (C, C, 1, 1), 0.3),
        "bn2b": bn(ks[7]),
        "conv_w": n(ks[8], (NCLS, C, 1, 1), 0.3),
        "conv_b": n(ks[9], (NCLS,), 0.1),
    }


def _fold_bn(bn, eps=1e-5):
    g, b, m, v = bn
    scale = g / jnp.sqrt(v + eps)
    shift = b - m * scale
    return scale.reshape(-1, 1), shift.reshape(-1, 1)


def _kernel_params(p):
    """Fold eval-mode BatchNorm scales into the conv weights (host side)."""
    C = p["dw1_w"].shape[0]

    def dw(w):   # torch (C, 1, 3, 3) -> (C, 9), column k = ky*3 + kx
        return w[:, 0].reshape(C, 9)

    def pw(w):   # torch (Cout, Cin, 1, 1) -> (Cout, Cin)
        return w[:, :, 0, 0]

    s1a, b1a = _fold_bn(p["bn1a"])
    s1b, b1b = _fold_bn(p["bn1b"])
    s2a, b2a = _fold_bn(p["bn2a"])
    s2b, b2b = _fold_bn(p["bn2b"])

    dw1 = dw(p["dw1_w"]) * s1a          # per-channel scale -> depthwise taps
    pw1 = pw(p["pw1_w"]) * s1b          # output-channel row scale
    dw2 = dw(p["dw2_w"]) * s2a
    pw2 = pw(p["pw2_w"]) * s2b

    return [dw1, b1a, pw1, b1b,
            dw2, b2a, pw2, b2b,
            pw(p["conv_w"]), p["conv_b"].reshape(-1, 1)]


# ----------------------------------------------------------------------------- wrapper
def classifier_forward(x_nchw, params, num_classes):
    B, C, H, W = x_nchw.shape
    H4, W4 = H + 4, W + 4
    N4 = H4 * W4                        # flattened padded grid
    NF = _round_up(N4, 128)             # lane-tile-rounded compute width
    PADF = _round_up(W4 + 1, 128)       # front halo (>= one row + 1), aligned
    NEXT = _round_up(PADF + NF + W4 + 1, 128)

    x = x_nchw.astype(jnp.float32)
    # Single pad pass; the halo'd (C, NEXT) layout is assembled inside the
    # kernel (no second full-activation HBM pad pass).
    x_flat = jnp.pad(x, ((0, 0), (0, 0), (2, 2), (2, 2))).reshape(B, C, N4)

    # (1, NF) interior mask: 1 on the true HxW pixels, 0 on the padding ring
    # and on the lane-rounding tail.
    mask2d = jnp.zeros((H4, W4), jnp.float32).at[2:H + 2, 2:W + 2].set(1.0)
    mask = jnp.pad(mask2d.reshape(1, N4), ((0, 0), (0, NF - N4)))

    kp = _kernel_params(params)

    def _full(a):
        nd = a.ndim
        return pl.BlockSpec(tuple(a.shape), lambda b, _nd=nd: (0,) * _nd)

    in_specs = ([pl.BlockSpec((1, C, N4), lambda b: (b, 0, 0)),
                 _full(mask)]
                + [_full(a) for a in kp])

    out_flat = pl.pallas_call(
        functools.partial(_classifier_kernel, W4=W4, N4=N4, NF=NF,
                          PADF=PADF, NEXT=NEXT),
        out_shape=jax.ShapeDtypeStruct((B, num_classes, NF), jnp.float32),
        grid=(B,),
        in_specs=in_specs,
        out_specs=pl.BlockSpec((1, num_classes, NF), lambda b: (b, 0, 0)),
        scratch_shapes=[pltpu.VMEM((C, NEXT), jnp.float32),    # x staging
                        pltpu.VMEM((C, NEXT), jnp.float32)],   # dsconv1 out
        compiler_params=pltpu.CompilerParams(
            # Scratch halos are initialized once at program_id==0 and carried
            # across steps -> the batch axis must be "arbitrary".
            dimension_semantics=("arbitrary",),
            vmem_limit_bytes=32 * 1024 * 1024),
    )(x_flat, mask, *kp)

    # lane-dense (B, NCLS, NF) -> NCHW interior; cheap XLA slice, no transpose.
    out = out_flat[:, :, :N4].reshape(B, num_classes, H4, W4)
    return out[:, :, 2:H + 2, 2:W + 2]


# ----------------------------------------------------------------------------- pure-JAX reference
def ref_forward(x, p, eps=1e-5):
    def bn(v, bnp):
        g, b, m, var = bnp
        inv = g / jnp.sqrt(var + eps)
        return v * inv[None, :, None, None] + (b - m * inv)[None, :, None, None]

    def conv(v, w, pad, groups=1):
        return lax.conv_general_dilated(
            v, w, (1, 1), ((pad, pad), (pad, pad)),
            dimension_numbers=("NCHW", "OIHW", "NCHW"),
            feature_group_count=groups, precision=lax.Precision.HIGHEST)

    def dsconv(v, dw_w, bn_a, pw_w, bn_b):
        v = jnp.maximum(bn(conv(v, dw_w, 1, groups=v.shape[1]), bn_a), 0.0)
        v = jnp.maximum(bn(conv(v, pw_w, 0), bn_b), 0.0)
        return v

    v = dsconv(x, p["dw1_w"], p["bn1a"], p["pw1_w"], p["bn1b"])
    v = dsconv(v, p["dw2_w"], p["bn2a"], p["pw2_w"], p["bn2b"])
    v = conv(v, p["conv_w"], 0) + p["conv_b"][None, :, None, None]
    return v


# ----------------------------------------------------------------------------- main
if __name__ == "__main__":
    B, C, H, W, NCLS = 2, 8, 16, 16, 6
    key = jax.random.PRNGKey(0)
    k_x, k_p = jax.random.split(key)
    x = jax.random.normal(k_x, (B, C, H, W), dtype=jnp.float32)
    params = init_params(k_p, C, NCLS)

    out = jax.block_until_ready(classifier_forward(x, params, NCLS))
    assert out.shape == (B, NCLS, H, W), out.shape

    ref = jax.block_until_ready(ref_forward(x, params))
    max_err = float(jnp.max(jnp.abs(out - ref)))
    # Default MXU precision (vs Precision.HIGHEST in the reference) is accepted
    # explicitly; the folded-BN f32 path stays well inside this tolerance.
    assert jnp.allclose(out, ref, atol=2e-2, rtol=2e-2), f"max abs err = {max_err}"

    print("KERNEL_OK")
</pallas_src>

<mosaic_0001>
module attributes {stable_mosaic.version = 11 : i64} {
  func.func @_classifier_kernel(%arg0: i32, %arg1: memref<1x8x400xf32, #tpu.memory_space<vmem>>, %arg2: memref<1x512xf32, #tpu.memory_space<vmem>>, %arg3: memref<8x9xf32, #tpu.memory_space<vmem>>, %arg4: memref<8x1xf32, #tpu.memory_space<vmem>>, %arg5: memref<8x8xf32, #tpu.memory_space<vmem>>, %arg6: memref<8x1xf32, #tpu.memory_space<vmem>>, %arg7: memref<8x9xf32, #tpu.memory_space<vmem>>, %arg8: memref<8x1xf32, #tpu.memory_space<vmem>>, %arg9: memref<8x8xf32, #tpu.memory_space<vmem>>, %arg10: memref<8x1xf32, #tpu.memory_space<vmem>>, %arg11: memref<6x8xf32, #tpu.memory_space<vmem>>, %arg12: memref<6x1xf32, #tpu.memory_space<vmem>>, %arg13: memref<1x6x512xf32, #tpu.memory_space<vmem>>, %arg14: memref<8x768xf32, #tpu.memory_space<vmem>>, %arg15: memref<8x768xf32, #tpu.memory_space<vmem>>) attributes {dimension_semantics = [#tpu.dimension_semantics<arbitrary>], iteration_bounds = array<i64: 2>, scalar_prefetch = 0 : i64, scratch_operands = 2 : i64, tpu.core_type = #tpu.core_type<tc>, window_params = [{transform_indices = @transform_0, window_bounds = array<i64: 1, 8, 400>}, {pipeline_mode = #tpu.pipeline_mode<synchronous>, transform_indices = @transform_1, window_bounds = array<i64: 1, 512>}, {pipeline_mode = #tpu.pipeline_mode<synchronous>, transform_indices = @transform_2, window_bounds = array<i64: 8, 9>}, {pipeline_mode = #tpu.pipeline_mode<synchronous>, transform_indices = @transform_3, window_bounds = array<i64: 8, 1>}, {pipeline_mode = #tpu.pipeline_mode<synchronous>, transform_indices = @transform_4, window_bounds = array<i64: 8, 8>}, {pipeline_mode = #tpu.pipeline_mode<synchronous>, transform_indices = @transform_5, window_bounds = array<i64: 8, 1>}, {pipeline_mode = #tpu.pipeline_mode<synchronous>, transform_indices = @transform_6, window_bounds = array<i64: 8, 9>}, {pipeline_mode = #tpu.pipeline_mode<synchronous>, transform_indices = @transform_7, window_bounds = array<i64: 8, 1>}, {pipeline_mode = #tpu.pipeline_mode<synchronous>, transform_indices = @transform_8, window_bounds = array<i64: 8, 8>}, {pipeline_mode = #tpu.pipeline_mode<synchronous>, transform_indices = @transform_9, window_bounds = array<i64: 8, 1>}, {pipeline_mode = #tpu.pipeline_mode<synchronous>, transform_indices = @transform_10, window_bounds = array<i64: 6, 8>}, {pipeline_mode = #tpu.pipeline_mode<synchronous>, transform_indices = @transform_11, window_bounds = array<i64: 6, 1>}, {transform_indices = @transform_12, window_bounds = array<i64: 1, 6, 512>}]} {
    %c0 = arith.constant 0 : index
    %c0_0 = arith.constant 0 : index
    %0 = vector.load %arg3[%c0, %c0_0] : memref<8x9xf32, #tpu.memory_space<vmem>>, vector<8x9xf32>
    %c0_1 = arith.constant 0 : index
    %c0_2 = arith.constant 0 : index
    %1 = vector.load %arg7[%c0_1, %c0_2] : memref<8x9xf32, #tpu.memory_space<vmem>>, vector<8x9xf32>
    %c0_3 = arith.constant 0 : index
    %c0_4 = arith.constant 0 : index
    %2 = vector.load %arg4[%c0_3, %c0_4] : memref<8x1xf32, #tpu.memory_space<vmem>>, vector<8x1xf32>
    %c0_5 = arith.constant 0 : index
    %c0_6 = arith.constant 0 : index
    %3 = vector.load %arg6[%c0_5, %c0_6] : memref<8x1xf32, #tpu.memory_space<vmem>>, vector<8x1xf32>
    %c0_7 = arith.constant 0 : index
    %c0_8 = arith.constant 0 : index
    %4 = vector.load %arg8[%c0_7, %c0_8] : memref<8x1xf32, #tpu.memory_space<vmem>>, vector<8x1xf32>
    %c0_9 = arith.constant 0 : index
    %c0_10 = arith.constant 0 : index
    %5 = vector.load %arg10[%c0_9, %c0_10] : memref<8x1xf32, #tpu.memory_space<vmem>>, vector<8x1xf32>
    %c0_11 = arith.constant 0 : index
    %c0_12 = arith.constant 0 : index
    %6 = vector.load %arg5[%c0_11, %c0_12] : memref<8x8xf32, #tpu.memory_space<vmem>>, vector<8x8xf32>
    %c0_13 = arith.constant 0 : index
    %c0_14 = arith.constant 0 : index
    %7 = vector.load %arg9[%c0_13, %c0_14] : memref<8x8xf32, #tpu.memory_space<vmem>>, vector<8x8xf32>
    %c0_15 = arith.constant 0 : index
    %c0_16 = arith.constant 0 : index
    %8 = vector.load %arg11[%c0_15, %c0_16] : memref<6x8xf32, #tpu.memory_space<vmem>>, vector<6x8xf32>
    %c0_17 = arith.constant 0 : index
    %c0_18 = arith.constant 0 : index
    %9 = vector.load %arg12[%c0_17, %c0_18] : memref<6x1xf32, #tpu.memory_space<vmem>>, vector<6x1xf32>
    %c0_19 = arith.constant 0 : index
    %c0_20 = arith.constant 0 : index
    %10 = vector.load %arg2[%c0_19, %c0_20] : memref<1x512xf32, #tpu.memory_space<vmem>>, vector<1x512xf32>
    %c0_i32 = arith.constant 0 : i32
    %11 = arith.cmpi eq, %arg0, %c0_i32 : i32
    %12 = arith.extui %11 : i1 to i32
    %c0_i32_21 = arith.constant 0 : i32
    %13 = arith.cmpi ne, %12, %c0_i32_21 : i32
    scf.if %13 {
      %cst_65 = arith.constant 0.000000e+00 : f32
      %132 = vector.broadcast %cst_65 : f32 to vector<8x768xf32>
      %c0_66 = arith.constant 0 : index
      %c0_67 = arith.constant 0 : index
      %133 = vector.load %arg14[%c0_66, %c0_67] : memref<8x768xf32, #tpu.memory_space<vmem>>, vector<8x768xf32>
      tpu.vector_store %arg14[%c0_66, %c0_67], %132 {strides = array<i32>} : memref<8x768xf32, #tpu.memory_space<vmem>>, vector<8x768xf32>,
      %cst_68 = arith.constant 0.000000e+00 : f32
      %134 = vector.broadcast %cst_68 : f32 to vector<8x768xf32>
      %c0_69 = arith.constant 0 : index
      %c0_70 = arith.constant 0 : index
      %135 = vector.load %arg15[%c0_69, %c0_70] : memref<8x768xf32, #tpu.memory_space<vmem>>, vector<8x768xf32>
      tpu.vector_store %arg15[%c0_69, %c0_70], %134 {strides = array<i32>} : memref<8x768xf32, #tpu.memory_space<vmem>>, vector<8x768xf32>,
    } else {
    }
    %c0_22 = arith.constant 0 : index
    %c0_23 = arith.constant 0 : index
    %c0_24 = arith.constant 0 : index
    %14 = vector.load %arg1[%c0_22, %c0_23, %c0_24] : memref<1x8x400xf32, #tpu.memory_space<vmem>>, vector<1x8x400xf32>
    %15 = vector.shape_cast %14 : vector<1x8x400xf32> to vector<8x400xf32>
    %c0_25 = arith.constant 0 : index
    %c128 = arith.constant 128 : index
    %16 = vector.load %arg14[%c0_25, %c128] : memref<8x768xf32, #tpu.memory_space<vmem>>, vector<8x400xf32>
    tpu.vector_store %arg14[%c0_25, %c128], %15 {strides = array<i32>} : memref<8x768xf32, #tpu.memory_space<vmem>>, vector<8x400xf32>,
    %c0_26 = arith.constant 0 : index
    %c107 = arith.constant 107 : index
    %17 = vector.load %arg14[%c0_26, %c107] : memref<8x768xf32, #tpu.memory_space<vmem>>, vector<8x512xf32>
    %18 = vector.extract_strided_slice %0 {offsets = [0, 0], sizes = [8, 1], strides = [1, 1]} : vector<8x9xf32> to vector<8x1xf32>
    %19 = vector.broadcast %18 : vector<8x1xf32> to vector<8x512xf32>
    %20 = arith.mulf %17, %19 : vector<8x512xf32>
    %c0_27 = arith.constant 0 : index
    %c108 = arith.constant 108 : index
    %21 = vector.load %arg14[%c0_27, %c108] : memref<8x768xf32, #tpu.memory_space<vmem>>, vector<8x512xf32>
    %22 = vector.extract_strided_slice %0 {offsets = [0, 1], sizes = [8, 1], strides = [1, 1]} : vector<8x9xf32> to vector<8x1xf32>
    %23 = vector.broadcast %22 : vector<8x1xf32> to vector<8x512xf32>
    %24 = arith.mulf %21, %23 : vector<8x512xf32>
    %25 = arith.addf %20, %24 : vector<8x512xf32>
    %c0_28 = arith.constant 0 : index
    %c109 = arith.constant 109 : index
    %26 = vector.load %arg14[%c0_28, %c109] : memref<8x768xf32, #tpu.memory_space<vmem>>, vector<8x512xf32>
    %27 = vector.extract_strided_slice %0 {offsets = [0, 2], sizes = [8, 1], strides = [1, 1]} : vector<8x9xf32> to vector<8x1xf32>
    %28 = vector.broadcast %27 : vector<8x1xf32> to vector<8x512xf32>
    %29 = arith.mulf %26, %28 : vector<8x512xf32>
    %30 = arith.addf %25, %29 : vector<8x512xf32>
    %c0_29 = arith.constant 0 : index
    %c127 = arith.constant 127 : index
    %31 = vector.load %arg14[%c0_29, %c127] : memref<8x768xf32, #tpu.memory_space<vmem>>, vector<8x512xf32>
    %32 = vector.extract_strided_slice %0 {offsets = [0, 3], sizes = [8, 1], strides = [1, 1]} : vector<8x9xf32> to vector<8x1xf32>
    %33 = vector.broadcast %32 : vector<8x1xf32> to vector<8x512xf32>
    %34 = arith.mulf %31, %33 : vector<8x512xf32>
    %35 = arith.addf %30, %34 : vector<8x512xf32>
    %c0_30 = arith.constant 0 : index
    %c128_31 = arith.constant 128 : index
    %36 = vector.load %arg14[%c0_30, %c128_31] : memref<8x768xf32, #tpu.memory_space<vmem>>, vector<8x512xf32>
    %37 = vector.extract_strided_slice %0 {offsets = [0, 4], sizes = [8, 1], strides = [1, 1]} : vector<8x9xf32> to vector<8x1xf32>
    %38 = vector.broadcast %37 : vector<8x1xf32> to vector<8x512xf32>
    %39 = arith.mulf %36, %38 : vector<8x512xf32>
    %40 = arith.addf %35, %39 : vector<8x512xf32>
    %c0_32 = arith.constant 0 : index
    %c129 = arith.constant 129 : index
    %41 = vector.load %arg14[%c0_32, %c129] : memref<8x768xf32, #tpu.memory_space<vmem>>, vector<8x512xf32>
    %42 = vector.extract_strided_slice %0 {offsets = [0, 5], sizes = [8, 1], strides = [1, 1]} : vector<8x9xf32> to vector<8x1xf32>
    %43 = vector.broadcast %42 : vector<8x1xf32> to vector<8x512xf32>
    %44 = arith.mulf %41, %43 : vector<8x512xf32>
    %45 = arith.addf %40, %44 : vector<8x512xf32>
    %c0_33 = arith.constant 0 : index
    %c147 = arith.constant 147 : index
    %46 = vector.load %arg14[%c0_33, %c147] : memref<8x768xf32, #tpu.memory_space<vmem>>, vector<8x512xf32>
    %47 = vector.extract_strided_slice %0 {offsets = [0, 6], sizes = [8, 1], strides = [1, 1]} : vector<8x9xf32> to vector<8x1xf32>
    %48 = vector.broadcast %47 : vector<8x1xf32> to vector<8x512xf32>
    %49 = arith.mulf %46, %48 : vector<8x512xf32>
    %50 = arith.addf %45, %49 : vector<8x512xf32>
    %c0_34 = arith.constant 0 : index
    %c148 = arith.constant 148 : index
    %51 = vector.load %arg14[%c0_34, %c148] : memref<8x768xf32, #tpu.memory_space<vmem>>, vector<8x512xf32>
    %52 = vector.extract_strided_slice %0 {offsets = [0, 7], sizes = [8, 1], strides = [1, 1]} : vector<8x9xf32> to vector<8x1xf32>
    %53 = vector.broadcast %52 : vector<8x1xf32> to vector<8x512xf32>
    %54 = arith.mulf %51, %53 : vector<8x512xf32>
    %55 = arith.addf %50, %54 : vector<8x512xf32>
    %c0_35 = arith.constant 0 : index
    %c149 = arith.constant 149 : index
    %56 = vector.load %arg14[%c0_35, %c149] : memref<8x768xf32, #tpu.memory_space<vmem>>, vector<8x512xf32>
    %57 = vector.extract_strided_slice %0 {offsets = [0, 8], sizes = [8, 1], strides = [1, 1]} : vector<8x9xf32> to vector<8x1xf32>
    %58 = vector.broadcast %57 : vector<8x1xf32> to vector<8x512xf32>
    %59 = arith.mulf %56, %58 : vector<8x512xf32>
    %60 = arith.addf %55, %59 : vector<8x512xf32>
    %61 = vector.broadcast %2 : vector<8x1xf32> to vector<8x512xf32>
    %62 = arith.addf %60, %61 : vector<8x512xf32>
    %cst = arith.constant 0.000000e+00 : f32
    %63 = vector.broadcast %cst : f32 to vector<8x512xf32>
    %64 = arith.maximumf %62, %63 : vector<8x512xf32>
    %cst_36 = arith.constant dense<0.000000e+00> : vector<8x512xf32>
    %65 = tpu.matmul %6, %64, %cst_36 {dimension_numbers = #tpu.dot_dimension_numbers<[1], [0], [0], [1], [0, 0, 1, 1], [], []>} : vector<8x8xf32>, vector<8x512xf32>, vector<8x512xf32> -> vector<8x512xf32>
    %66 = vector.broadcast %3 : vector<8x1xf32> to vector<8x512xf32>
    %67 = arith.addf %65, %66 : vector<8x512xf32>
    %cst_37 = arith.constant 0.000000e+00 : f32
    %68 = vector.broadcast %cst_37 : f32 to vector<8x512xf32>
    %69 = arith.maximumf %67, %68 : vector<8x512xf32>
    %70 = vector.broadcast %10 : vector<1x512xf32> to vector<8x512xf32>
    %71 = arith.mulf %69, %70 : vector<8x512xf32>
    %c0_38 = arith.constant 0 : index
    %c128_39 = arith.constant 128 : index
    %72 = vector.load %arg15[%c0_38, %c128_39] : memref<8x768xf32, #tpu.memory_space<vmem>>, vector<8x512xf32>
    tpu.vector_store %arg15[%c0_38, %c128_39], %71 {strides = array<i32>} : memref<8x768xf32, #tpu.memory_space<vmem>>, vector<8x512xf32>,
    %c0_40 = arith.constant 0 : index
    %c107_41 = arith.constant 107 : index
    %73 = vector.load %arg15[%c0_40, %c107_41] : memref<8x768xf32, #tpu.memory_space<vmem>>, vector<8x512xf32>
    %74 = vector.extract_strided_slice %1 {offsets = [0, 0], sizes = [8, 1], strides = [1, 1]} : vector<8x9xf32> to vector<8x1xf32>
    %75 = vector.broadcast %74 : vector<8x1xf32> to vector<8x512xf32>
    %76 = arith.mulf %73, %75 : vector<8x512xf32>
    %c0_42 = arith.constant 0 : index
    %c108_43 = arith.constant 108 : index
    %77 = vector.load %arg15[%c0_42, %c108_43] : memref<8x768xf32, #tpu.memory_space<vmem>>, vector<8x512xf32>
    %78 = vector.extract_strided_slice %1 {offsets = [0, 1], sizes = [8, 1], strides = [1, 1]} : vector<8x9xf32> to vector<8x1xf32>
    %79 = vector.broadcast %78 : vector<8x1xf32> to vector<8x512xf32>
    %80 = arith.mulf %77, %79 : vector<8x512xf32>
    %81 = arith.addf %76, %80 : vector<8x512xf32>
    %c0_44 = arith.constant 0 : index
    %c109_45 = arith.constant 109 : index
    %82 = vector.load %arg15[%c0_44, %c109_45] : memref<8x768xf32, #tpu.memory_space<vmem>>, vector<8x512xf32>
    %83 = vector.extract_strided_slice %1 {offsets = [0, 2], sizes = [8, 1], strides = [1, 1]} : vector<8x9xf32> to vector<8x1xf32>
    %84 = vector.broadcast %83 : vector<8x1xf32> to vector<8x512xf32>
    %85 = arith.mulf %82, %84 : vector<8x512xf32>
    %86 = arith.addf %81, %85 : vector<8x512xf32>
    %c0_46 = arith.constant 0 : index
    %c127_47 = arith.constant 127 : index
    %87 = vector.load %arg15[%c0_46, %c127_47] : memref<8x768xf32, #tpu.memory_space<vmem>>, vector<8x512xf32>
    %88 = vector.extract_strided_slice %1 {offsets = [0, 3], sizes = [8, 1], strides = [1, 1]} : vector<8x9xf32> to vector<8x1xf32>
    %89 = vector.broadcast %88 : vector<8x1xf32> to vector<8x512xf32>
    %90 = arith.mulf %87, %89 : vector<8x512xf32>
    %91 = arith.addf %86, %90 : vector<8x512xf32>
    %c0_48 = arith.constant 0 : index
    %c128_49 = arith.constant 128 : index
    %92 = vector.load %arg15[%c0_48, %c128_49] : memref<8x768xf32, #tpu.memory_space<vmem>>, vector<8x512xf32>
    %93 = vector.extract_strided_slice %1 {offsets = [0, 4], sizes = [8, 1], strides = [1, 1]} : vector<8x9xf32> to vector<8x1xf32>
    %94 = vector.broadcast %93 : vector<8x1xf32> to vector<8x512xf32>
    %95 = arith.mulf %92, %94 : vector<8x512xf32>
    %96 = arith.addf %91, %95 : vector<8x512xf32>
    %c0_50 = arith.constant 0 : index
    %c129_51 = arith.constant 129 : index
    %97 = vector.load %arg15[%c0_50, %c129_51] : memref<8x768xf32, #tpu.memory_space<vmem>>, vector<8x512xf32>
    %98 = vector.extract_strided_slice %1 {offsets = [0, 5], sizes = [8, 1], strides = [1, 1]} : vector<8x9xf32> to vector<8x1xf32>
    %99 = vector.broadcast %98 : vector<8x1xf32> to vector<8x512xf32>
    %100 = arith.mulf %97, %99 : vector<8x512xf32>
    %101 = arith.addf %96, %100 : vector<8x512xf32>
    %c0_52 = arith.constant 0 : index
    %c147_53 = arith.constant 147 : index
    %102 = vector.load %arg15[%c0_52, %c147_53] : memref<8x768xf32, #tpu.memory_space<vmem>>, vector<8x512xf32>
    %103 = vector.extract_strided_slice %1 {offsets = [0, 6], sizes = [8, 1], strides = [1, 1]} : vector<8x9xf32> to vector<8x1xf32>
    %104 = vector.broadcast %103 : vector<8x1xf32> to vector<8x512xf32>
    %105 = arith.mulf %102, %104 : vector<8x512xf32>
    %106 = arith.addf %101, %105 : vector<8x512xf32>
    %c0_54 = arith.constant 0 : index
    %c148_55 = arith.constant 148 : index
    %107 = vector.load %arg15[%c0_54, %c148_55] : memref<8x768xf32, #tpu.memory_space<vmem>>, vector<8x512xf32>
    %108 = vector.extract_strided_slice %1 {offsets = [0, 7], sizes = [8, 1], strides = [1, 1]} : vector<8x9xf32> to vector<8x1xf32>
    %109 = vector.broadcast %108 : vector<8x1xf32> to vector<8x512xf32>
    %110 = arith.mulf %107, %109 : vector<8x512xf32>
    %111 = arith.addf %106, %110 : vector<8x512xf32>
    %c0_56 = arith.constant 0 : index
    %c149_57 = arith.constant 149 : index
    %112 = vector.load %arg15[%c0_56, %c149_57] : memref<8x768xf32, #tpu.memory_space<vmem>>, vector<8x512xf32>
    %113 = vector.extract_strided_slice %1 {offsets = [0, 8], sizes = [8, 1], strides = [1, 1]} : vector<8x9xf32> to vector<8x1xf32>
    %114 = vector.broadcast %113 : vector<8x1xf32> to vector<8x512xf32>
    %115 = arith.mulf %112, %114 : vector<8x512xf32>
    %116 = arith.addf %111, %115 : vector<8x512xf32>
    %117 = vector.broadcast %4 : vector<8x1xf32> to vector<8x512xf32>
    %118 = arith.addf %116, %117 : vector<8x512xf32>
    %cst_58 = arith.constant 0.000000e+00 : f32
    %119 = vector.broadcast %cst_58 : f32 to vector<8x512xf32>
    %120 = arith.maximumf %118, %119 : vector<8x512xf32>
    %cst_59 = arith.constant dense<0.000000e+00> : vector<8x512xf32>
    %121 = tpu.matmul %7, %120, %cst_59 {dimension_numbers = #tpu.dot_dimension_numbers<[1], [0], [0], [1], [0, 0, 1, 1], [], []>} : vector<8x8xf32>, vector<8x512xf32>, vector<8x512xf32> -> vector<8x512xf32>
    %122 = vector.broadcast %5 : vector<8x1xf32> to vector<8x512xf32>
    %123 = arith.addf %121, %122 : vector<8x512xf32>
    %cst_60 = arith.constant 0.000000e+00 : f32
    %124 = vector.broadcast %cst_60 : f32 to vector<8x512xf32>
    %125 = arith.maximumf %123, %124 : vector<8x512xf32>
    %cst_61 = arith.constant dense<0.000000e+00> : vector<6x512xf32>
    %126 = tpu.matmul %8, %125, %cst_61 {dimension_numbers = #tpu.dot_dimension_numbers<[1], [0], [0], [1], [0, 0, 1, 1], [], []>} : vector<6x8xf32>, vector<8x512xf32>, vector<6x512xf32> -> vector<6x512xf32>
    %127 = vector.broadcast %9 : vector<6x1xf32> to vector<6x512xf32>
    %128 = arith.addf %126, %127 : vector<6x512xf32>
    %c0_62 = arith.constant 0 : index
    %c0_63 = arith.constant 0 : index
    %c0_64 = arith.constant 0 : index
    %129 = vector.load %arg13[%c0_62, %c0_63, %c0_64] : memref<1x6x512xf32, #tpu.memory_space<vmem>>, vector<1x6x512xf32>
    %130 = vector.shape_cast %129 : vector<1x6x512xf32> to vector<6x512xf32>
    %131 = vector.shape_cast %128 : vector<6x512xf32> to vector<1x6x512xf32>
    tpu.vector_store %arg13[%c0_62, %c0_63, %c0_64], %131 {strides = array<i32>} : memref<1x6x512xf32, #tpu.memory_space<vmem>>, vector<1x6x512xf32>,
    return
  }
  func.func @transform_0(%arg0: i32) -> (i32, i32, i32) {
    %c0_i32 = arith.constant 0 : i32
    %c0_i32_0 = arith.constant 0 : i32
    %c0_i32_1 = arith.constant 0 : i32
    return %arg0, %c0_i32, %c0_i32_0 : i32, i32, i32
  }
  func.func @transform_1(%arg0: i32) -> (i32, i32) {
    %c0_i32 = arith.constant 0 : i32
    %c0_i32_0 = arith.constant 0 : i32
    %c0_i32_1 = arith.constant 0 : i32
    return %c0_i32, %c0_i32_0 : i32, i32
  }
  func.func @transform_2(%arg0: i32) -> (i32, i32) {
    %c0_i32 = arith.constant 0 : i32
    %c0_i32_0 = arith.constant 0 : i32
    %c0_i32_1 = arith.constant 0 : i32
    return %c0_i32, %c0_i32_0 : i32, i32
  }
  func.func @transform_3(%arg0: i32) -> (i32, i32) {
    %c0_i32 = arith.constant 0 : i32
    %c0_i32_0 = arith.constant 0 : i32
    %c0_i32_1 = arith.constant 0 : i32
    return %c0_i32, %c0_i32_0 : i32, i32
  }
  func.func @transform_4(%arg0: i32) -> (i32, i32) {
    %c0_i32 = arith.constant 0 : i32
    %c0_i32_0 = arith.constant 0 : i32
    %c0_i32_1 = arith.constant 0 : i32
    return %c0_i32, %c0_i32_0 : i32, i32
  }
  func.func @transform_5(%arg0: i32) -> (i32, i32) {
    %c0_i32 = arith.constant 0 : i32
    %c0_i32_0 = arith.constant 0 : i32
    %c0_i32_1 = arith.constant 0 : i32
    return %c0_i32, %c0_i32_0 : i32, i32
  }
  func.func @transform_6(%arg0: i32) -> (i32, i32) {
    %c0_i32 = arith.constant 0 : i32
    %c0_i32_0 = arith.constant 0 : i32
    %c0_i32_1 = arith.constant 0 : i32
    return %c0_i32, %c0_i32_0 : i32, i32
  }
  func.func @transform_7(%arg0: i32) -> (i32, i32) {
    %c0_i32 = arith.constant 0 : i32
    %c0_i32_0 = arith.constant 0 : i32
    %c0_i32_1 = arith.constant 0 : i32
    return %c0_i32, %c0_i32_0 : i32, i32
  }
  func.func @transform_8(%arg0: i32) -> (i32, i32) {
    %c0_i32 = arith.constant 0 : i32
    %c0_i32_0 = arith.constant 0 : i32
    %c0_i32_1 = arith.constant 0 : i32
    return %c0_i32, %c0_i32_0 : i32, i32
  }
  func.func @transform_9(%arg0: i32) -> (i32, i32) {
    %c0_i32 = arith.constant 0 : i32
    %c0_i32_0 = arith.constant 0 : i32
    %c0_i32_1 = arith.constant 0 : i32
    return %c0_i32, %c0_i32_0 : i32, i32
  }
  func.func @transform_10(%arg0: i32) -> (i32, i32) {
    %c0_i32 = arith.constant 0 : i32
    %c0_i32_0 = arith.constant 0 : i32
    %c0_i32_1 = arith.constant 0 : i32
    return %c0_i32, %c0_i32_0 : i32, i32
  }
  func.func @transform_11(%arg0: i32) -> (i32, i32) {
    %c0_i32 = arith.constant 0 : i32
    %c0_i32_0 = arith.constant 0 : i32
    %c0_i32_1 = arith.constant 0 : i32
    return %c0_i32, %c0_i32_0 : i32, i32
  }
  func.func @transform_12(%arg0: i32) -> (i32, i32, i32) {
    %c0_i32 = arith.constant 0 : i32
    %c0_i32_0 = arith.constant 0 : i32
    %c0_i32_1 = arith.constant 0 : i32
    return %arg0, %c0_i32, %c0_i32_0 : i32, i32, i32
  }
}

</mosaic_0001>

<llo_original>
// kernel: tpu_custom_call.1
$region0: #{tpu_custom_call.1}
  #allocation0 [shape = 'u32[]', space=smem, size = 0x4, offset = 0x4, fixed_abs, tag = 'smem constant byte address 0x4 - core index']
  #allocation1 [shape = 'u32[144,128]{1,0:T(1,128)}', space=vmem, size = 0x12000, scoped, tag = 'internal scratch']
  #allocation2 [shape = 'f32[8,768]{1,0:T(8,128)}', space=vmem, size = 0x6000, scoped, tag = 'scratch operand']
  #allocation3 [shape = 'f32[8,768]{1,0:T(8,128)}', space=vmem, size = 0x6000, scoped, tag = 'scratch operand']
  %s0 = inlined_call_operand.hbm [shape: f32[2,8,400], index: 0, kind: input, shape index: {}]
  %s1 = inlined_call_operand.vmem [shape: f32[1,512], index: 1, kind: input, shape index: {}]
  %s2 = inlined_call_operand.vmem [shape: f32[8,9], index: 2, kind: input, shape index: {}]
  %s3 = inlined_call_operand.vmem [shape: f32[8,1], index: 3, kind: input, shape index: {}]
  %s4 = inlined_call_operand.vmem [shape: f32[8,8], index: 4, kind: input, shape index: {}]
  %s5 = inlined_call_operand.vmem [shape: f32[8,1], index: 5, kind: input, shape index: {}]
  %s6 = inlined_call_operand.vmem [shape: f32[8,9], index: 6, kind: input, shape index: {}]
  %s7 = inlined_call_operand.vmem [shape: f32[8,1], index: 7, kind: input, shape index: {}]
  %s8 = inlined_call_operand.vmem [shape: f32[8,8], index: 8, kind: input, shape index: {}]
  %s9 = inlined_call_operand.vmem [shape: f32[8,1], index: 9, kind: input, shape index: {}]
  %s10 = inlined_call_operand.vmem [shape: f32[6,8], index: 10, kind: input, shape index: {}]
  %s11 = inlined_call_operand.vmem [shape: f32[6,1], index: 11, kind: input, shape index: {}]
  %s12 = inlined_call_operand.vmem [shape: f32[2,6,512], index: 12, kind: output, shape index: {}]
  %s13 = sld [smem:[#allocation0]]
  $region89: #{tpu_custom_call.1} parent=0
    _
  %s15 = ssub.s32 1, %s13
  %s16 = scalar_select 0, %s15, %s13
  $region1: #{tpu_custom_call.1} parent=0
    #allocation4 [shape = 'u8[32768]{0}', space=vmem, size = 0x8000, scoped, tag = 'input window, operand 0']
    #allocation5 [shape = 's32[2]{0}', space=sflag, size = 0x8, scoped, tag = 'scoped memory for tpu_custom_call.1']
    %17 = vsyncpa [#allocation5], 0
    %s18 = scalar_lea.sflag [#allocation5], 1
    %19 = vsyncpa %s18, 0
    loop: start=0, step=1, limit=4
    $region2: #{tpu_custom_call.1} parent=1 // loop_pre_header
      _
    $region3: #{tpu_custom_call.1} parent=1 // loop_header
      %s21 = sphi 0, %s25
      %p22 = scmp.ge.s32.totalorder %s21, 4
      %s31 = sphi 0, %s33
      %s34 = sphi 0, %s31
      %s35 = sphi 0, %s34
      %s51 = sphi 0, %s35
      %s55 = sphi 0, %s55
      %s57 = sphi 0, %s55
      %s58 = sphi 0, %s57
      %s72 = sphi 0, %s58
      %s76 = sphi 0, %s76
      %s78 = sphi 0, %s76
      %s79 = sphi 0, %s78
      %s93 = sphi 0, %s79
      %s97 = sphi 0, %s97
      %s99 = sphi 0, %s97
      %s100 = sphi 0, %s99
      %s114 = sphi 0, %s100
      %s118 = sphi 0, %s118
      %s120 = sphi 0, %s118
      %s121 = sphi 0, %s120
      %s135 = sphi 0, %s121
      %s139 = sphi 0, %s139
      %s141 = sphi 0, %s139
      %s142 = sphi 0, %s141
      %s156 = sphi 0, %s142
      %s160 = sphi 0, %s160
      %s162 = sphi 0, %s160
      %s163 = sphi 0, %s162
      %s177 = sphi 0, %s163
      %s181 = sphi 0, %s181
      %s183 = sphi 0, %s181
      %s184 = sphi 0, %s183
      %s198 = sphi 0, %s184
      %s202 = sphi 0, %s202
      %s204 = sphi 0, %s202
      %s205 = sphi 0, %s204
      %s219 = sphi 0, %s205
      %s223 = sphi 0, %s223
      %s225 = sphi 0, %s223
      %s226 = sphi 0, %s225
      %s240 = sphi 0, %s226
      %s244 = sphi 0, %s244
      %s246 = sphi 0, %s244
      %s247 = sphi 0, %s246
      %s261 = sphi 0, %s247
      %s265 = sphi 0, %s265
      %s267 = sphi 0, %s265
      %s268 = sphi 0, %s267
      %s282 = sphi 0, %s268
      %s288 = sphi 0, %s290
      %s291 = sphi 0, %s288
      %s292 = sphi 0, %s291
      %s308 = sphi 0, %s292
    $region4: #{tpu_custom_call.1} parent=1 // loop_header_branch
      %24 = sbr.rel (%p22) target = $region8
    $region5: #{tpu_custom_call.1} parent=1 // loop_body
      %s26 = ssub.s32 %s21, 1
      %s27 = ssub.s32 %s21, 2
      %s28 = sadd.s32 %s21, 1
      %s29 = ssub.s32 %s21, %s28
      %p30 = scmp.eq.s32.totalorder %s29, 0
      %s32 = sadd.s32 %s31, 1
      %s33 = scalar_select %p30, %s31, %s32
      %p36 = pneg %p30
      %p37 = scmp.eq.s32.totalorder %s21, 1
      %p38 = por %p36, %p37
      %p39 = scmp.ne.s32.totalorder %s31, %s34
      %p40 = scmp.eq.s32.totalorder %s21, 0
      %p41 = por %p39, %p40
      %p42 = scmp.ne.s32.totalorder %s31, %s34
      %p43 = scmp.eq.s32.totalorder %s26, 1
      %p44 = por %p42, %p43
      %p45 = scmp.ne.s32.totalorder %s34, %s35
      %p46 = scmp.eq.s32.totalorder %s26, 0
      %p47 = por %p45, %p46
      %p48 = scmp.ne.s32.totalorder %s34, %s35
      %p49 = scmp.eq.s32.totalorder %s27, 1
      %p50 = por %p48, %p49
      %p52 = scmp.ne.s32.totalorder %s35, %s51
      %p53 = scmp.eq.s32.totalorder %s27, 0
      %p54 = por %p52, %p53
      %s56 = sadd.s32 %s55, 1
      %p59 = scmp.eq.s32.totalorder %s21, 1
      %p60 = scmp.ne.s32.totalorder %s55, %s57
      %p61 = scmp.eq.s32.totalorder %s21, 0
      %p62 = por %p60, %p61
      %p63 = scmp.ne.s32.totalorder %s55, %s57
      %p64 = scmp.eq.s32.totalorder %s26, 1
      %p65 = por %p63, %p64
      %p66 = scmp.ne.s32.totalorder %s57, %s58
      %p67 = scmp.eq.s32.totalorder %s26, 0
      %p68 = por %p66, %p67
      %p69 = scmp.ne.s32.totalorder %s57, %s58
      %p70 = scmp.eq.s32.totalorder %s27, 1
      %p71 = por %p69, %p70
      %p73 = scmp.ne.s32.totalorder %s58, %s72
      %p74 = scmp.eq.s32.totalorder %s27, 0
      %p75 = por %p73, %p74
      %s77 = sadd.s32 %s76, 1
      %p80 = scmp.eq.s32.totalorder %s21, 1
      %p81 = scmp.ne.s32.totalorder %s76, %s78
      %p82 = scmp.eq.s32.totalorder %s21, 0
      %p83 = por %p81, %p82
      %p84 = scmp.ne.s32.totalorder %s76, %s78
      %p85 = scmp.eq.s32.totalorder %s26, 1
      %p86 = por %p84, %p85
      %p87 = scmp.ne.s32.totalorder %s78, %s79
      %p88 = scmp.eq.s32.totalorder %s26, 0
      %p89 = por %p87, %p88
      %p90 = scmp.ne.s32.totalorder %s78, %s79
      %p91 = scmp.eq.s32.totalorder %s27, 1
      %p92 = por %p90, %p91
      %p94 = scmp.ne.s32.totalorder %s79, %s93
      %p95 = scmp.eq.s32.totalorder %s27, 0
      %p96 = por %p94, %p95
      %s98 = sadd.s32 %s97, 1
      %p101 = scmp.eq.s32.totalorder %s21, 1
      %p102 = scmp.ne.s32.totalorder %s97, %s99
      %p103 = scmp.eq.s32.totalorder %s21, 0
      %p104 = por %p102, %p103
      %p105 = scmp.ne.s32.totalorder %s97, %s99
      %p106 = scmp.eq.s32.totalorder %s26, 1
      %p107 = por %p105, %p106
      %p108 = scmp.ne.s32.totalorder %s99, %s100
      %p109 = scmp.eq.s32.totalorder %s26, 0
      %p110 = por %p108, %p109
      %p111 = scmp.ne.s32.totalorder %s99, %s100
      %p112 = scmp.eq.s32.totalorder %s27, 1
      %p113 = por %p111, %p112
      %p115 = scmp.ne.s32.totalorder %s100, %s114
      %p116 = scmp.eq.s32.totalorder %s27, 0
      %p117 = por %p115, %p116
      %s119 = sadd.s32 %s118, 1
      %p122 = scmp.eq.s32.totalorder %s21, 1
      %p123 = scmp.ne.s32.totalorder %s118, %s120
      %p124 = scmp.eq.s32.totalorder %s21, 0
      %p125 = por %p123, %p124
      %p126 = scmp.ne.s32.totalorder %s118, %s120
      %p127 = scmp.eq.s32.totalorder %s26, 1
      %p128 = por %p126, %p127
      %p129 = scmp.ne.s32.totalorder %s120, %s121
      %p130 = scmp.eq.s32.totalorder %s26, 0
      %p131 = por %p129, %p130
      %p132 = scmp.ne.s32.totalorder %s120, %s121
      %p133 = scmp.eq.s32.totalorder %s27, 1
      %p134 = por %p132, %p133
      %p136 = scmp.ne.s32.totalorder %s121, %s135
      %p137 = scmp.eq.s32.totalorder %s27, 0
      %p138 = por %p136, %p137
      %s140 = sadd.s32 %s139, 1
      %p143 = scmp.eq.s32.totalorder %s21, 1
      %p144 = scmp.ne.s32.totalorder %s139, %s141
      %p145 = scmp.eq.s32.totalorder %s21, 0
      %p146 = por %p144, %p145
      %p147 = scmp.ne.s32.totalorder %s139, %s141
      %p148 = scmp.eq.s32.totalorder %s26, 1
      %p149 = por %p147, %p148
      %p150 = scmp.ne.s32.totalorder %s141, %s142
      %p151 = scmp.eq.s32.totalorder %s26, 0
      %p152 = por %p150, %p151
      %p153 = scmp.ne.s32.totalorder %s141, %s142
      %p154 = scmp.eq.s32.totalorder %s27, 1
      %p155 = por %p153, %p154
      %p157 = scmp.ne.s32.totalorder %s142, %s156
      %p158 = scmp.eq.s32.totalorder %s27, 0
      %p159 = por %p157, %p158
      %s161 = sadd.s32 %s160, 1
      %p164 = scmp.eq.s32.totalorder %s21, 1
      %p165 = scmp.ne.s32.totalorder %s160, %s162
      %p166 = scmp.eq.s32.totalorder %s21, 0
      %p167 = por %p165, %p166
      %p168 = scmp.ne.s32.totalorder %s160, %s162
      %p169 = scmp.eq.s32.totalorder %s26, 1
      %p170 = por %p168, %p169
      %p171 = scmp.ne.s32.totalorder %s162, %s163
      %p172 = scmp.eq.s32.totalorder %s26, 0
      %p173 = por %p171, %p172
      %p174 = scmp.ne.s32.totalorder %s162, %s163
      %p175 = scmp.eq.s32.totalorder %s27, 1
      %p176 = por %p174, %p175
      %p178 = scmp.ne.s32.totalorder %s163, %s177
      %p179 = scmp.eq.s32.totalorder %s27, 0
      %p180 = por %p178, %p179
      %s182 = sadd.s32 %s181, 1
      %p185 = scmp.eq.s32.totalorder %s21, 1
      %p186 = scmp.ne.s32.totalorder %s181, %s183
      %p187 = scmp.eq.s32.totalorder %s21, 0
      %p188 = por %p186, %p187
      %p189 = scmp.ne.s32.totalorder %s181, %s183
      %p190 = scmp.eq.s32.totalorder %s26, 1
      %p191 = por %p189, %p190
      %p192 = scmp.ne.s32.totalorder %s183, %s184
      %p193 = scmp.eq.s32.totalorder %s26, 0
      %p194 = por %p192, %p193
      %p195 = scmp.ne.s32.totalorder %s183, %s184
      %p196 = scmp.eq.s32.totalorder %s27, 1
      %p197 = por %p195, %p196
      %p199 = scmp.ne.s32.totalorder %s184, %s198
      %p200 = scmp.eq.s32.totalorder %s27, 0
      %p201 = por %p199, %p200
      %s203 = sadd.s32 %s202, 1
      %p206 = scmp.eq.s32.totalorder %s21, 1
      %p207 = scmp.ne.s32.totalorder %s202, %s204
      %p208 = scmp.eq.s32.totalorder %s21, 0
      %p209 = por %p207, %p208
      %p210 = scmp.ne.s32.totalorder %s202, %s204
      %p211 = scmp.eq.s32.totalorder %s26, 1
      %p212 = por %p210, %p211
      %p213 = scmp.ne.s32.totalorder %s204, %s205
      %p214 = scmp.eq.s32.totalorder %s26, 0
      %p215 = por %p213, %p214
      %p216 = scmp.ne.s32.totalorder %s204, %s205
      %p217 = scmp.eq.s32.totalorder %s27, 1
      %p218 = por %p216, %p217
      %p220 = scmp.ne.s32.totalorder %s205, %s219
      %p221 = scmp.eq.s32.totalorder %s27, 0
      %p222 = por %p220, %p221
      %s224 = sadd.s32 %s223, 1
      %p227 = scmp.eq.s32.totalorder %s21, 1
      %p228 = scmp.ne.s32.totalorder %s223, %s225
      %p229 = scmp.eq.s32.totalorder %s21, 0
      %p230 = por %p228, %p229
      %p231 = scmp.ne.s32.totalorder %s223, %s225
      %p232 = scmp.eq.s32.totalorder %s26, 1
      %p233 = por %p231, %p232
      %p234 = scmp.ne.s32.totalorder %s225, %s226
      %p235 = scmp.eq.s32.totalorder %s26, 0
      %p236 = por %p234, %p235
      %p237 = scmp.ne.s32.totalorder %s225, %s226
      %p238 = scmp.eq.s32.totalorder %s27, 1
      %p239 = por %p237, %p238
      %p241 = scmp.ne.s32.totalorder %s226, %s240
      %p242 = scmp.eq.s32.totalorder %s27, 0
      %p243 = por %p241, %p242
      %s245 = sadd.s32 %s244, 1
      %p248 = scmp.eq.s32.totalorder %s21, 1
      %p249 = scmp.ne.s32.totalorder %s244, %s246
      %p250 = scmp.eq.s32.totalorder %s21, 0
      %p251 = por %p249, %p250
      %p252 = scmp.ne.s32.totalorder %s244, %s246
      %p253 = scmp.eq.s32.totalorder %s26, 1
      %p254 = por %p252, %p253
      %p255 = scmp.ne.s32.totalorder %s246, %s247
      %p256 = scmp.eq.s32.totalorder %s26, 0
      %p257 = por %p255, %p256
      %p258 = scmp.ne.s32.totalorder %s246, %s247
      %p259 = scmp.eq.s32.totalorder %s27, 1
      %p260 = por %p258, %p259
      %p262 = scmp.ne.s32.totalorder %s247, %s261
      %p263 = scmp.eq.s32.totalorder %s27, 0
      %p264 = por %p262, %p263
      %s266 = sadd.s32 %s265, 1
      %p269 = scmp.eq.s32.totalorder %s21, 1
      %p270 = scmp.ne.s32.totalorder %s265, %s267
      %p271 = scmp.eq.s32.totalorder %s21, 0
      %p272 = por %p270, %p271
      %p273 = scmp.ne.s32.totalorder %s265, %s267
      %p274 = scmp.eq.s32.totalorder %s26, 1
      %p275 = por %p273, %p274
      %p276 = scmp.ne.s32.totalorder %s267, %s268
      %p277 = scmp.eq.s32.totalorder %s26, 0
      %p278 = por %p276, %p277
      %p279 = scmp.ne.s32.totalorder %s267, %s268
      %p280 = scmp.eq.s32.totalorder %s27, 1
      %p281 = por %p279, %p280
      %p283 = scmp.ne.s32.totalorder %s268, %s282
      %p284 = scmp.eq.s32.totalorder %s27, 0
      %p285 = por %p283, %p284
      %s286 = ssub.s32 %s21, %s28
      %p287 = scmp.eq.s32.totalorder %s286, 0
      %s289 = sadd.s32 %s288, 1
      %s290 = scalar_select %p287, %s288, %s289
      %p293 = pneg %p287
      %p294 = scmp.eq.s32.totalorder %s21, 1
      %p295 = por %p293, %p294
      %p296 = scmp.ne.s32.totalorder %s288, %s291
      %p297 = scmp.eq.s32.totalorder %s21, 0
      %p298 = por %p296, %p297
      %p299 = scmp.ne.s32.totalorder %s288, %s291
      %p300 = scmp.eq.s32.totalorder %s26, 1
      %p301 = por %p299, %p300
      %p302 = scmp.ne.s32.totalorder %s291, %s292
      %p303 = scmp.eq.s32.totalorder %s26, 0
      %p304 = por %p302, %p303
      %p305 = scmp.ne.s32.totalorder %s291, %s292
      %p306 = scmp.eq.s32.totalorder %s27, 1
      %p307 = por %p305, %p306
      %p309 = scmp.ne.s32.totalorder %s292, %s308
      %p310 = scmp.eq.s32.totalorder %s27, 0
      %p311 = por %p309, %p310
      %p312 = scmp.le.s32.totalorder 1, %s21
      %p313 = scmp.lt.s32.totalorder %s21, 3
      %p314 = pnand %p312, %p313
      %p315 = pneg %p314
      // Predicated region
      $region9: #{tpu_custom_call.1} parent=5 // pred_check
        _
      $region10: #{tpu_custom_call.1} parent=5 // pred_check_branch
        %317 = sbr.rel (%p314) target = $region12
      $region11: #{tpu_custom_call.1} parent=5 // pred_region
        %s318 = ssub.s32 %s21, 1
        // Predicated region
        $region13: #{tpu_custom_call.1} parent=11 // pred_check
          %p319 = pneg %p68
        $region14: #{tpu_custom_call.1} parent=11 // pred_check_branch
          %321 = sbr.rel (%p319) target = $region16
        $region15: #{tpu_custom_call.1} parent=11 // pred_region
          _
        $region16: #{tpu_custom_call.1} parent=11 // pred_fallthru
          _
        // Predicated region
        $region17: #{tpu_custom_call.1} parent=11 // pred_check
          %p322 = pneg %p89
        $region18: #{tpu_custom_call.1} parent=11 // pred_check_branch
          %324 = sbr.rel (%p322) target = $region20
        $region19: #{tpu_custom_call.1} parent=11 // pred_region
          _
        $region20: #{tpu_custom_call.1} parent=11 // pred_fallthru
          _
        // Predicated region
        $region21: #{tpu_custom_call.1} parent=11 // pred_check
          %p325 = pneg %p110
        $region22: #{tpu_custom_call.1} parent=11 // pred_check_branch
          %327 = sbr.rel (%p325) target = $region24
        $region23: #{tpu_custom_call.1} parent=11 // pred_region
          _
        $region24: #{tpu_custom_call.1} parent=11 // pred_fallthru
          _
        // Predicated region
        $region25: #{tpu_custom_call.1} parent=11 // pred_check
          %p328 = pneg %p131
        $region26: #{tpu_custom_call.1} parent=11 // pred_check_branch
          %330 = sbr.rel (%p328) target = $region28
        $region27: #{tpu_custom_call.1} parent=11 // pred_region
          _
        $region28: #{tpu_custom_call.1} parent=11 // pred_fallthru
          _
        // Predicated region
        $region29: #{tpu_custom_call.1} parent=11 // pred_check
          %p331 = pneg %p152
        $region30: #{tpu_custom_call.1} parent=11 // pred_check_branch
          %333 = sbr.rel (%p331) target = $region32
        $region31: #{tpu_custom_call.1} parent=11 // pred_region
          _
        $region32: #{tpu_custom_call.1} parent=11 // pred_fallthru
          _
        // Predicated region
        $region33: #{tpu_custom_call.1} parent=11 // pred_check
          %p334 = pneg %p173
        $region34: #{tpu_custom_call.1} parent=11 // pred_check_branch
          %336 = sbr.rel (%p334) target = $region36
        $region35: #{tpu_custom_call.1} parent=11 // pred_region
          _
        $region36: #{tpu_custom_call.1} parent=11 // pred_fallthru
          _
        // Predicated region
        $region37: #{tpu_custom_call.1} parent=11 // pred_check
          %p337 = pneg %p194
        $region38: #{tpu_custom_call.1} parent=11 // pred_check_branch
          %339 = sbr.rel (%p337) target = $region40
        $region39: #{tpu_custom_call.1} parent=11 // pred_region
          _
        $region40: #{tpu_custom_call.1} parent=11 // pred_fallthru
          _
        // Predicated region
        $region41: #{tpu_custom_call.1} parent=11 // pred_check
          %p340 = pneg %p215
        $region42: #{tpu_custom_call.1} parent=11 // pred_check_branch
          %342 = sbr.rel (%p340) target = $region44
        $region43: #{tpu_custom_call.1} parent=11 // pred_region
          _
        $region44: #{tpu_custom_call.1} parent=11 // pred_fallthru
          _
        // Predicated region
        $region45: #{tpu_custom_call.1} parent=11 // pred_check
          %p343 = pneg %p236
        $region46: #{tpu_custom_call.1} parent=11 // pred_check_branch
          %345 = sbr.rel (%p343) target = $region48
        $region47: #{tpu_custom_call.1} parent=11 // pred_region
          _
        $region48: #{tpu_custom_call.1} parent=11 // pred_fallthru
          _
        // Predicated region
        $region49: #{tpu_custom_call.1} parent=11 // pred_check
          %p346 = pneg %p257
        $region50: #{tpu_custom_call.1} parent=11 // pred_check_branch
          %348 = sbr.rel (%p346) target = $region52
        $region51: #{tpu_custom_call.1} parent=11 // pred_region
          _
        $region52: #{tpu_custom_call.1} parent=11 // pred_fallthru
          _
        // Predicated region
        $region53: #{tpu_custom_call.1} parent=11 // pred_check
          %p349 = pneg %p278
        $region54: #{tpu_custom_call.1} parent=11 // pred_check_branch
          %351 = sbr.rel (%p349) target = $region56
        $region55: #{tpu_custom_call.1} parent=11 // pred_region
          _
        $region56: #{tpu_custom_call.1} parent=11 // pred_fallthru
          _
      $region12: #{tpu_custom_call.1} parent=5 // pred_fallthru
        _
      %p352 = scmp.lt.s32.totalorder %s21, 2
      // Predicated region
      $region57: #{tpu_custom_call.1} parent=5 // pred_check
        %p353 = pneg %p352
      $region58: #{tpu_custom_call.1} parent=5 // pred_check_branch
        %355 = sbr.rel (%p353) target = $region60
      $region59: #{tpu_custom_call.1} parent=5 // pred_region
        // Predicated region
        $region61: #{tpu_custom_call.1} parent=59 // pred_check
          %p356 = pneg %p41
        $region62: #{tpu_custom_call.1} parent=59 // pred_check_branch
          %358 = sbr.rel (%p356) target = $region64
        $region63: #{tpu_custom_call.1} parent=59 // pred_region
          %s359 = sand.u32 %s31, 1
          %s360 = scalar_lea.sflag [#allocation5], %s359
          %s361 = sand.u32 %s31, 1
          %s362 = smul.addr %s361, 32
          %s363 = scalar_lea.vmem [#allocation4], %s362
          %s365 = ssub.s32 512, 512
          %366 = vsyncadd %s360, %s365
          %s367 = smul.addr %s21, 4
          %s368 = smul.addr %s367, 128
          %s369 = scalar_lea.hbm %s0, %s368
          %s371 = sshll.u32 %s363, 4
          %s372 = int_to_ptr.vmem [resolvable:$true] %s371
          %374 = dma.hbm_to_vmem [thread:$0]  %s369, 512, %s372, %s360
        $region64: #{tpu_custom_call.1} parent=59 // pred_fallthru
          _
      $region60: #{tpu_custom_call.1} parent=5 // pred_fallthru
        _
      %p375 = scmp.le.s32.totalorder 1, %s21
      %p376 = scmp.lt.s32.totalorder %s21, 3
      %p377 = pnand %p375, %p376
      %p378 = pneg %p377
      // Predicated region
      $region65: #{tpu_custom_call.1} parent=5 // pred_check
        _
      $region66: #{tpu_custom_call.1} parent=5 // pred_check_branch
        %380 = sbr.rel (%p377) target = $region68
      $region67: #{tpu_custom_call.1} parent=5 // pred_region
        %s381 = ssub.s32 %s21, 1
        %s382 = sand.u32 %s34, 1
        %s383 = scalar_lea.sflag [#allocation5], %s382
        %s384 = sand.u32 %s34, 1
        %s385 = smul.addr %s384, 32
        %s386 = scalar_lea.vmem [#allocation4], %s385
        // Predicated region
        $region69: #{tpu_custom_call.1} parent=67 // pred_check
          %p387 = pneg %p47
        $region70: #{tpu_custom_call.1} parent=67 // pred_check_branch
          %389 = sbr.rel (%p387) target = $region72
        $region71: #{tpu_custom_call.1} parent=67 // pred_region
          %390 = dma.done %s383, 512
        $region72: #{tpu_custom_call.1} parent=67 // pred_fallthru
          _
        %s391 = sand.u32 %s34, 1
        %s392 = scalar_lea.sflag [#allocation5], %s391
        %s393 = sand.u32 %s34, 1
        %s394 = smul.addr %s393, 32
        %s395 = scalar_lea.vmem [#allocation4], %s394
        %p396 = pneg %p47
        %p397 = pneg %p44
        %p398 = pneg %p68
        %p399 = pneg %p65
        %p400 = pneg %p89
        %p401 = pneg %p86
        %p402 = pneg %p110
        %p403 = pneg %p107
        %p404 = pneg %p131
        %p405 = pneg %p128
        %p406 = pneg %p152
        %p407 = pneg %p149
        %p408 = pneg %p173
        %p409 = pneg %p170
        %p410 = pneg %p194
        %p411 = pneg %p191
        %p412 = pneg %p215
        %p413 = pneg %p212
        %p414 = pneg %p236
        %p415 = pneg %p233
        %p416 = pneg %p257
        %p417 = pneg %p254
        %p418 = pneg %p278
        %p419 = pneg %p275
        %p420 = pneg %p304
        %p421 = pneg %p301
        %p422 = scmp.lt.s32.totalorder %s26, 1
        %s423 = scalar_select %p422, %s26, 1
        %s424 = smul.addr %s423, 4
        %s425 = smul.addr %s424, 8
        %s426 = scalar_lea.vmem %s12, %s425
        %p427 = scmp.lt.s32.totalorder %s26, 1
        %s428 = scalar_select %p427, %s26, 1
        %s429 = smul.addr %s428, 4
        %s430 = smul.addr %s429, 8
        %s431 = scalar_lea.vmem %s12, %s430
        %v432 = vld [vmem:[%s2] sm:$0xff]
        %v433 = vld [vmem:[%s6] sm:$0xff]
        %v434 = vld [vmem:[%s3] sm:$0xff]
        %v435 = vld [vmem:[%s5] sm:$0xff]
        %v436 = vld [vmem:[%s7] sm:$0xff]
        %v437 = vld [vmem:[%s9] sm:$0xff]
        %v438 = vld [vmem:[%s4] sm:$0xff]
        %v439 = vld [vmem:[%s8] sm:$0xff]
        %v440 = vld [vmem:[%s10] sm:$0x3f]
        %v441 = vld [vmem:[%s11] sm:$0x3f]
        %v442 = vld [vmem:[%s1] sm:$0xf]
        %p443 = scmp.eq.s32.totalorder %s26, 0
        // Predicated region
        $region73: #{tpu_custom_call.1} parent=67 // pred_check
          %p444 = pneg %p443
        $region74: #{tpu_custom_call.1} parent=67 // pred_check_branch
          %446 = sbr.rel (%p444) target = $region76
        $region75: #{tpu_custom_call.1} parent=67 // pred_region
          %447 = vst [vmem:[#allocation2] sm:$0xff] 0.0
          %448 = vst [vmem:[#allocation2 + $0x8] sm:$0xff] 0.0
          %449 = vst [vmem:[#allocation2 + $0x10] sm:$0xff] 0.0
          %450 = vst [vmem:[#allocation2 + $0x18] sm:$0xff] 0.0
          %451 = vst [vmem:[#allocation2 + $0x20] sm:$0xff] 0.0
          %452 = vst [vmem:[#allocation2 + $0x28] sm:$0xff] 0.0
          %453 = vst [vmem:[#allocation3] sm:$0xff] 0.0
          %454 = vst [vmem:[#allocation3 + $0x8] sm:$0xff] 0.0
          %455 = vst [vmem:[#allocation3 + $0x10] sm:$0xff] 0.0
          %456 = vst [vmem:[#allocation3 + $0x18] sm:$0xff] 0.0
          %457 = vst [vmem:[#allocation3 + $0x20] sm:$0xff] 0.0
          %458 = vst [vmem:[#allocation3 + $0x28] sm:$0xff] 0.0
        $region76: #{tpu_custom_call.1} parent=67 // pred_fallthru
          _
        %v459 = vld [vmem:[%s386] sm:$0xff]
        %v460 = vld [vmem:[%s386 + $0x8] sm:$0xff]
        %v461 = vld [vmem:[%s386 + $0x10] sm:$0xff]
        %v462 = vld [vmem:[%s386 + $0x18] sm:$0xff]
        %463 = vst [vmem:[#allocation2 + $0x8] sm:$0xff] %v459
        %464 = vst [vmem:[#allocation2 + $0x10] sm:$0xff] %v460
        %465 = vst [vmem:[#allocation2 + $0x18] sm:$0xff] %v461
        %vm466 = vcmask 130048
        %467 = vst.msk [vmem:[#allocation2 + $0x20] sm:$0xff] %vm466, %v462
        %v468 = vld [vmem:[#allocation2] sm:$0xff]
        %v469 = vld [vmem:[#allocation2 + $0x8] sm:$0xff]
        %v470 = vld [vmem:[#allocation2 + $0x10] sm:$0xff]
        %v471 = vld [vmem:[#allocation2 + $0x18] sm:$0xff]
        %v472 = vld [vmem:[#allocation2 + $0x20] sm:$0xff]
        %474 = vset.pattern.permute.xlu0 0
        %475 = vperm.xlu0 %474, %v432
        %v476 = vpop.permute.xlu0 %475
        %v478 = vmul.f32 %v468, %v476
        %v479 = vmul.f32 %v469, %v476
        %v480 = vmul.f32 %v470, %v476
        %v481 = vmul.f32 %v471, %v476
        %v482 = vmul.f32 %v472, %v476
        %483 = vset.pattern.permute.xlu0 1
        %484 = vperm.xlu0 %483, %v432
        %v485 = vpop.permute.xlu0 %484
        %v487 = vmul.f32 %v468, %v485
        %v488 = vmul.f32 %v469, %v485
        %v489 = vmul.f32 %v470, %v485
        %v490 = vmul.f32 %v471, %v485
        %v491 = vmul.f32 %v472, %v485
        %497 = vrot.lane.b32.xlu0 %v487, 127
        %v498 = vpop.permute.xlu0 %497
        %499 = vrot.lane.b32.xlu0 %v488, 127
        %v500 = vpop.permute.xlu0 %499
        %501 = vrot.lane.b32.xlu0 %v489, 127
        %v502 = vpop.permute.xlu0 %501
        %503 = vrot.lane.b32.xlu0 %v490, 127
        %v504 = vpop.permute.xlu0 %503
        %505 = vrot.lane.b32.xlu0 %v491, 127
        %v506 = vpop.permute.xlu0 %505
        %vm507 = vcmask 1039360
        %v508 = vsel %vm507, %v498, %v500
        %v509 = vsel %vm507, %v500, %v502
        %v510 = vsel %vm507, %v502, %v504
        %v511 = vsel %vm507, %v504, %v506
        %v517 = vadd.f32 %v478, %v508
        %v518 = vadd.f32 %v479, %v509
        %v519 = vadd.f32 %v480, %v510
        %v520 = vadd.f32 %v481, %v511
        %v521 = vadd.f32 %v482, %v506
        %522 = vset.pattern.permute.xlu0 2
        %523 = vperm.xlu0 %522, %v432
        %v524 = vpop.permute.xlu0 %523
        %v526 = vmul.f32 %v468, %v524
        %v527 = vmul.f32 %v469, %v524
        %v528 = vmul.f32 %v470, %v524
        %v529 = vmul.f32 %v471, %v524
        %v530 = vmul.f32 %v472, %v524
        %536 = vrot.lane.b32.xlu0 %v526, 126
        %v537 = vpop.permute.xlu0 %536
        %538 = vrot.lane.b32.xlu0 %v527, 126
        %v539 = vpop.permute.xlu0 %538
        %540 = vrot.lane.b32.xlu0 %v528, 126
        %v541 = vpop.permute.xlu0 %540
        %542 = vrot.lane.b32.xlu0 %v529, 126
        %v543 = vpop.permute.xlu0 %542
        %544 = vrot.lane.b32.xlu0 %v530, 126
        %v545 = vpop.permute.xlu0 %544
        %vm546 = vcmask 1031168
        %v547 = vsel %vm546, %v537, %v539
        %v548 = vsel %vm546, %v539, %v541
        %v549 = vsel %vm546, %v541, %v543
        %v550 = vsel %vm546, %v543, %v545
        %v556 = vadd.f32 %v517, %v547
        %v557 = vadd.f32 %v518, %v548
        %v558 = vadd.f32 %v519, %v549
        %v559 = vadd.f32 %v520, %v550
        %v560 = vadd.f32 %v521, %v545
        %561 = vset.pattern.permute.xlu0 3
        %562 = vperm.xlu0 %561, %v432
        %v563 = vpop.permute.xlu0 %562
        %v565 = vmul.f32 %v468, %v563
        %v566 = vmul.f32 %v469, %v563
        %v567 = vmul.f32 %v470, %v563
        %v568 = vmul.f32 %v471, %v563
        %v569 = vmul.f32 %v472, %v563
        %575 = vrot.lane.b32.xlu0 %v565, 108
        %v576 = vpop.permute.xlu0 %575
        %577 = vrot.lane.b32.xlu0 %v566, 108
        %v578 = vpop.permute.xlu0 %577
        %579 = vrot.lane.b32.xlu0 %v567, 108
        %v580 = vpop.permute.xlu0 %579
        %581 = vrot.lane.b32.xlu0 %v568, 108
        %v582 = vpop.permute.xlu0 %581
        %583 = vrot.lane.b32.xlu0 %v569, 108
        %v584 = vpop.permute.xlu0 %583
        %vm585 = vcmask 883712
        %v586 = vsel %vm585, %v576, %v578
        %v587 = vsel %vm585, %v578, %v580
        %v588 = vsel %vm585, %v580, %v582
        %v589 = vsel %vm585, %v582, %v584
        %v595 = vadd.f32 %v556, %v586
        %v596 = vadd.f32 %v557, %v587
        %v597 = vadd.f32 %v558, %v588
        %v598 = vadd.f32 %v559, %v589
        %v599 = vadd.f32 %v560, %v584
        %600 = vset.pattern.permute.xlu0 4
        %601 = vperm.xlu0 %600, %v432
        %v602 = vpop.permute.xlu0 %601
        %v604 = vmul.f32 %v469, %v602
        %v605 = vmul.f32 %v470, %v602
        %v606 = vmul.f32 %v471, %v602
        %v607 = vmul.f32 %v472, %v602
        %612 = vrot.lane.b32.xlu0 %v604, 107
        %v613 = vpop.permute.xlu0 %612
        %614 = vrot.lane.b32.xlu0 %v605, 107
        %v615 = vpop.permute.xlu0 %614
        %616 = vrot.lane.b32.xlu0 %v606, 107
        %v617 = vpop.permute.xlu0 %616
        %618 = vrot.lane.b32.xlu0 %v607, 107
        %v619 = vpop.permute.xlu0 %618
        %vm620 = vcmask 875520
        %v621 = vsel %vm620, %v613, %v615
        %v622 = vsel %vm620, %v615, %v617
        %v623 = vsel %vm620, %v617, %v619
        %v629 = vadd.f32 %v595, %v613
        %v630 = vadd.f32 %v596, %v621
        %v631 = vadd.f32 %v597, %v622
        %v632 = vadd.f32 %v598, %v623
        %v633 = vadd.f32 %v599, %v619
        %v634 = vld [vmem:[#allocation2 + $0x8] sm:$0xff]
        %v635 = vld [vmem:[#allocation2 + $0x10] sm:$0xff]
        %v636 = vld [vmem:[#allocation2 + $0x18] sm:$0xff]
        %v637 = vld [vmem:[#allocation2 + $0x20] sm:$0xff]
        %v638 = vld [vmem:[#allocation2 + $0x28] sm:$0xff]
        %639 = vset.pattern.permute.xlu0 5
        %640 = vperm.xlu0 %639, %v432
        %v641 = vpop.permute.xlu0 %640
        %v643 = vmul.f32 %v634, %v641
        %v644 = vmul.f32 %v635, %v641
        %v645 = vmul.f32 %v636, %v641
        %v646 = vmul.f32 %v637, %v641
        %v647 = vmul.f32 %v638, %v641
        %653 = vrot.lane.b32.xlu0 %v643, 106
        %v654 = vpop.permute.xlu0 %653
        %655 = vrot.lane.b32.xlu0 %v644, 106
        %v656 = vpop.permute.xlu0 %655
        %657 = vrot.lane.b32.xlu0 %v645, 106
        %v658 = vpop.permute.xlu0 %657
        %659 = vrot.lane.b32.xlu0 %v646, 106
        %v660 = vpop.permute.xlu0 %659
        %661 = vrot.lane.b32.xlu0 %v647, 106
        %v662 = vpop.permute.xlu0 %661
        %vm663 = vcmask 867328
        %v664 = vsel %vm663, %v654, %v656
        %v665 = vsel %vm663, %v656, %v658
        %v666 = vsel %vm663, %v658, %v660
        %v667 = vsel %vm663, %v660, %v662
        %v673 = vadd.f32 %v629, %v654
        %v674 = vadd.f32 %v630, %v664
        %v675 = vadd.f32 %v631, %v665
        %v676 = vadd.f32 %v632, %v666
        %v677 = vadd.f32 %v633, %v667
        %678 = vset.pattern.permute.xlu0 6
        %679 = vperm.xlu0 %678, %v432
        %v680 = vpop.permute.xlu0 %679
        %v682 = vmul.f32 %v634, %v680
        %v683 = vmul.f32 %v635, %v680
        %v684 = vmul.f32 %v636, %v680
        %v685 = vmul.f32 %v637, %v680
        %v686 = vmul.f32 %v638, %v680
        %692 = vrot.lane.b32.xlu0 %v682, 88
        %v693 = vpop.permute.xlu0 %692
        %694 = vrot.lane.b32.xlu0 %v683, 88
        %v695 = vpop.permute.xlu0 %694
        %696 = vrot.lane.b32.xlu0 %v684, 88
        %v697 = vpop.permute.xlu0 %696
        %698 = vrot.lane.b32.xlu0 %v685, 88
        %v699 = vpop.permute.xlu0 %698
        %700 = vrot.lane.b32.xlu0 %v686, 88
        %v701 = vpop.permute.xlu0 %700
        %vm702 = vcmask 719872
        %v703 = vsel %vm702, %v693, %v695
        %v704 = vsel %vm702, %v695, %v697
        %v705 = vsel %vm702, %v697, %v699
        %v706 = vsel %vm702, %v699, %v701
        %v712 = vadd.f32 %v673, %v693
        %v713 = vadd.f32 %v674, %v703
        %v714 = vadd.f32 %v675, %v704
        %v715 = vadd.f32 %v676, %v705
        %v716 = vadd.f32 %v677, %v706
        %717 = vset.pattern.permute.xlu0 7
        %718 = vperm.xlu0 %717, %v432
        %v719 = vpop.permute.xlu0 %718
        %v721 = vmul.f32 %v634, %v719
        %v722 = vmul.f32 %v635, %v719
        %v723 = vmul.f32 %v636, %v719
        %v724 = vmul.f32 %v637, %v719
        %v725 = vmul.f32 %v638, %v719
        %731 = vrot.lane.b32.xlu0 %v721, 87
        %v732 = vpop.permute.xlu0 %731
        %733 = vrot.lane.b32.xlu0 %v722, 87
        %v734 = vpop.permute.xlu0 %733
        %735 = vrot.lane.b32.xlu0 %v723, 87
        %v736 = vpop.permute.xlu0 %735
        %737 = vrot.lane.b32.xlu0 %v724, 87
        %v738 = vpop.permute.xlu0 %737
        %739 = vrot.lane.b32.xlu0 %v725, 87
        %v740 = vpop.permute.xlu0 %739
        %vm741 = vcmask 711680
        %v742 = vsel %vm741, %v732, %v734
        %v743 = vsel %vm741, %v734, %v736
        %v744 = vsel %vm741, %v736, %v738
        %v745 = vsel %vm741, %v738, %v740
        %v751 = vadd.f32 %v712, %v732
        %v752 = vadd.f32 %v713, %v742
        %v753 = vadd.f32 %v714, %v743
        %v754 = vadd.f32 %v715, %v744
        %v755 = vadd.f32 %v716, %v745
        %756 = vset.pattern.permute.xlu0 8
        %757 = vperm.xlu0 %756, %v432
        %v758 = vpop.permute.xlu0 %757
        %v760 = vmul.f32 %v634, %v758
        %v761 = vmul.f32 %v635, %v758
        %v762 = vmul.f32 %v636, %v758
        %v763 = vmul.f32 %v637, %v758
        %v764 = vmul.f32 %v638, %v758
        %770 = vrot.lane.b32.xlu0 %v760, 86
        %v771 = vpop.permute.xlu0 %770
        %772 = vrot.lane.b32.xlu0 %v761, 86
        %v773 = vpop.permute.xlu0 %772
        %774 = vrot.lane.b32.xlu0 %v762, 86
        %v775 = vpop.permute.xlu0 %774
        %776 = vrot.lane.b32.xlu0 %v763, 86
        %v777 = vpop.permute.xlu0 %776
        %778 = vrot.lane.b32.xlu0 %v764, 86
        %v779 = vpop.permute.xlu0 %778
        %vm780 = vcmask 703488
        %v781 = vsel %vm780, %v771, %v773
        %v782 = vsel %vm780, %v773, %v775
        %v783 = vsel %vm780, %v775, %v777
        %v784 = vsel %vm780, %v777, %v779
        %v790 = vadd.f32 %v751, %v771
        %v791 = vadd.f32 %v752, %v781
        %v792 = vadd.f32 %v753, %v782
        %v793 = vadd.f32 %v754, %v783
        %v794 = vadd.f32 %v755, %v784
        %796 = vset.pattern.permute.xlu0 0
        %797 = vperm.xlu0 %796, %v434
        %v798 = vpop.permute.xlu0 %797
        %v800 = vadd.f32 %v790, %v798
        %v801 = vadd.f32 %v791, %v798
        %v802 = vadd.f32 %v792, %v798
        %v803 = vadd.f32 %v793, %v798
        %v804 = vadd.f32 %v794, %v798
        %v805 = vmax.f32 %v800, 0.0
        %v806 = vmax.f32 %v801, 0.0
        %v807 = vmax.f32 %v802, 0.0
        %v808 = vmax.f32 %v803, 0.0
        %v809 = vmax.f32 %v804, 0.0
        %811 = vset.pattern.permute.xlu0 0
        %812 = vperm.xlu0 %811, %v435
        %v813 = vpop.permute.xlu0 %812
        %820 = vrot.lane.b32.xlu0 %v805, 21
        %v821 = vpop.permute.xlu0 %820
        %822 = vrot.lane.b32.xlu0 %v806, 21
        %v823 = vpop.permute.xlu0 %822
        %824 = vrot.lane.b32.xlu0 %v807, 21
        %v825 = vpop.permute.xlu0 %824
        %826 = vrot.lane.b32.xlu0 %v808, 21
        %v827 = vpop.permute.xlu0 %826
        %828 = vrot.lane.b32.xlu0 %v809, 21
        %v829 = vpop.permute.xlu0 %828
        %vm830 = vcmask 171008
        %v831 = vsel %vm830, %v821, %v823
        %v832 = vsel %vm830, %v823, %v825
        %v833 = vsel %vm830, %v825, %v827
        %v834 = vsel %vm830, %v827, %v829
        %vm839 = vcmask 64512
        %v841 = vsel %vm839, %v438, 0
        %843 = vmatprep.subr.mxu0 0.0
        %844 = vmatpush1.msra.mxu0 0.0
        %845 = vmatprep.subr.mxu0 0.0
        %846 = vmatpush1.msra.mxu0 0.0
        %847 = vmatprep.subr.mxu0 0.0
        %848 = vmatpush1.msra.mxu0 0.0
        %849 = vmatprep.subr.mxu0 0.0
        %850 = vmatpush1.msra.mxu0 0.0
        %851 = vmatprep.subr.mxu0 0.0
        %852 = vmatpush1.msra.mxu0 0.0
        %853 = vmatprep.subr.mxu0 0.0
        %854 = vmatpush1.msra.mxu0 0.0
        %855 = vmatprep.subr.mxu0 0.0
        %856 = vmatpush1.msra.mxu0 0.0
        %857 = vmatprep.subr.mxu0 0.0
        %858 = vmatpush1.msra.mxu0 0.0
        %859 = vmatprep.subr.mxu0 0.0
        %860 = vmatpush1.msra.mxu0 0.0
        %861 = vmatprep.subr.mxu0 0.0
        %862 = vmatpush1.msra.mxu0 0.0
        %863 = vmatprep.subr.mxu0 0.0
        %864 = vmatpush1.msra.mxu0 0.0
        %865 = vmatprep.subr.mxu0 0.0
        %866 = vmatpush1.msra.mxu0 0.0
        %867 = vmatprep.subr.mxu0 0.0
        %868 = vmatpush1.msra.mxu0 0.0
        %869 = vmatprep.subr.mxu0 0.0
        %870 = vmatpush1.msra.mxu0 0.0
        %871 = vmatprep.subr.mxu0 0.0
        %872 = vmatpush1.msra.mxu0 0.0
        %873 = vmatprep.subr.mxu0 %v832
        %874 = vmatpush1.msra.mxu0 %v831
        %875 = vmatprep.subr.mxu0 0.0
        %876 = vmatpush2.msra.mxu0 0.0
        %877 = vmatprep.subr.mxu0 0.0
        %878 = vmatpush2.msra.mxu0 0.0
        %879 = vmatprep.subr.mxu0 0.0
        %880 = vmatpush2.msra.mxu0 0.0
        %881 = vmatprep.subr.mxu0 0.0
        %882 = vmatpush2.msra.mxu0 0.0
        %883 = vmatprep.subr.mxu0 0.0
        %884 = vmatpush2.msra.mxu0 0.0
        %885 = vmatprep.subr.mxu0 0.0
        %886 = vmatpush2.msra.mxu0 0.0
        %887 = vmatprep.subr.mxu0 0.0
        %888 = vmatpush2.msra.mxu0 0.0
        %889 = vmatprep.subr.mxu0 0.0
        %890 = vmatpush2.msra.mxu0 0.0
        %891 = vmatprep.subr.mxu0 0.0
        %892 = vmatpush2.msra.mxu0 0.0
        %893 = vmatprep.subr.mxu0 0.0
        %894 = vmatpush2.msra.mxu0 0.0
        %895 = vmatprep.subr.mxu0 0.0
        %896 = vmatpush2.msra.mxu0 0.0
        %897 = vmatprep.subr.mxu0 0.0
        %898 = vmatpush2.msra.mxu0 0.0
        %899 = vmatprep.subr.mxu0 0.0
        %900 = vmatpush2.msra.mxu0 0.0
        %901 = vmatprep.subr.mxu0 0.0
        %902 = vmatpush2.msra.mxu0 0.0
        %903 = vmatprep.subr.mxu0 0.0
        %904 = vmatpush2.msra.mxu0 0.0
        %905 = vmatprep.subr.mxu0 0.0
        %906 = vmatpush2.msra.mxu0 0.0
        %907 = vmatprep.mubr.f32.mxu0 0.0
        %908 = vmatmul.mubr.f32.gmra.mxu0 %v841
        %v909 = vpop.f32.mrf.mxu0
        %v910 = vadd.f32 %v813, %v909
        %v911 = vpop.f32.mrf.mxu0
        %v912 = vadd.f32 %v813, %v911
        %913 = vdwg.mxu0
        %914 = vmatprep.subr.mxu0 0.0
        %915 = vmatpush1.msra.mxu0 0.0
        %916 = vmatprep.subr.mxu0 0.0
        %917 = vmatpush1.msra.mxu0 0.0
        %918 = vmatprep.subr.mxu0 0.0
        %919 = vmatpush1.msra.mxu0 0.0
        %920 = vmatprep.subr.mxu0 0.0
        %921 = vmatpush1.msra.mxu0 0.0
        %922 = vmatprep.subr.mxu0 0.0
        %923 = vmatpush1.msra.mxu0 0.0
        %924 = vmatprep.subr.mxu0 0.0
        %925 = vmatpush1.msra.mxu0 0.0
        %926 = vmatprep.subr.mxu0 0.0
        %927 = vmatpush1.msra.mxu0 0.0
        %928 = vmatprep.subr.mxu0 0.0
        %929 = vmatpush1.msra.mxu0 0.0
        %930 = vmatprep.subr.mxu0 0.0
        %931 = vmatpush1.msra.mxu0 0.0
        %932 = vmatprep.subr.mxu0 0.0
        %933 = vmatpush1.msra.mxu0 0.0
        %934 = vmatprep.subr.mxu0 0.0
        %935 = vmatpush1.msra.mxu0 0.0
        %936 = vmatprep.subr.mxu0 0.0
        %937 = vmatpush1.msra.mxu0 0.0
        %938 = vmatprep.subr.mxu0 0.0
        %939 = vmatpush1.msra.mxu0 0.0
        %940 = vmatprep.subr.mxu0 0.0
        %941 = vmatpush1.msra.mxu0 0.0
        %942 = vmatprep.subr.mxu0 0.0
        %943 = vmatpush1.msra.mxu0 0.0
        %944 = vmatprep.subr.mxu0 %v834
        %945 = vmatpush1.msra.mxu0 %v833
        %946 = vmatprep.subr.mxu0 0.0
        %947 = vmatpush2.msra.mxu0 0.0
        %948 = vmatprep.subr.mxu0 0.0
        %949 = vmatpush2.msra.mxu0 0.0
        %950 = vmatprep.subr.mxu0 0.0
        %951 = vmatpush2.msra.mxu0 0.0
        %952 = vmatprep.subr.mxu0 0.0
        %953 = vmatpush2.msra.mxu0 0.0
        %954 = vmatprep.subr.mxu0 0.0
        %955 = vmatpush2.msra.mxu0 0.0
        %956 = vmatprep.subr.mxu0 0.0
        %957 = vmatpush2.msra.mxu0 0.0
        %958 = vmatprep.subr.mxu0 0.0
        %959 = vmatpush2.msra.mxu0 0.0
        %960 = vmatprep.subr.mxu0 0.0
        %961 = vmatpush2.msra.mxu0 0.0
        %962 = vmatprep.subr.mxu0 0.0
        %963 = vmatpush2.msra.mxu0 0.0
        %964 = vmatprep.subr.mxu0 0.0
        %965 = vmatpush2.msra.mxu0 0.0
        %966 = vmatprep.subr.mxu0 0.0
        %967 = vmatpush2.msra.mxu0 0.0
        %968 = vmatprep.subr.mxu0 0.0
        %969 = vmatpush2.msra.mxu0 0.0
        %970 = vmatprep.subr.mxu0 0.0
        %971 = vmatpush2.msra.mxu0 0.0
        %972 = vmatprep.subr.mxu0 0.0
        %973 = vmatpush2.msra.mxu0 0.0
        %974 = vmatprep.subr.mxu0 0.0
        %975 = vmatpush2.msra.mxu0 0.0
        %976 = vmatprep.subr.mxu0 0.0
        %977 = vmatpush2.msra.mxu0 0.0
        %978 = vmatprep.mubr.f32.mxu0 0.0
        %979 = vmatmul.mubr.f32.gmra.mxu0 %v841
        %v980 = vpop.f32.mrf.mxu0
        %v981 = vadd.f32 %v813, %v980
        %v982 = vpop.f32.mrf.mxu0
        %v983 = vadd.f32 %v813, %v982
        %984 = vdwg.mxu0
        %v985 = vmax.f32 %v910, 0.0
        %v986 = vmax.f32 %v912, 0.0
        %v987 = vmax.f32 %v981, 0.0
        %v988 = vmax.f32 %v983, 0.0
        %v990 = vlaneseq
        %v991 = vshrl.u32 %v990, 7
        %v992 = vsub.s32 0, %v991
        %v993 = vrot.slane %v442, %v992
        %v994 = vlaneseq
        %v995 = vshrl.u32 %v994, 7
        %v996 = vsub.s32 1, %v995
        %v997 = vrot.slane %v442, %v996
        %v998 = vlaneseq
        %v999 = vshrl.u32 %v998, 7
        %v1000 = vsub.s32 2, %v999
        %v1001 = vrot.slane %v442, %v1000
        %v1002 = vlaneseq
        %v1003 = vshrl.u32 %v1002, 7
        %v1004 = vsub.s32 3, %v1003
        %v1005 = vrot.slane %v442, %v1004
        %v1010 = vmul.f32 %v985, %v993
        %v1011 = vmul.f32 %v986, %v997
        %v1012 = vmul.f32 %v987, %v1001
        %v1013 = vmul.f32 %v988, %v1005
        %1014 = vst [vmem:[#allocation3 + $0x8] sm:$0xff] %v1010
        %1015 = vst [vmem:[#allocation3 + $0x10] sm:$0xff] %v1011
        %1016 = vst [vmem:[#allocation3 + $0x18] sm:$0xff] %v1012
        %1017 = vst [vmem:[#allocation3 + $0x20] sm:$0xff] %v1013
        %v1018 = vld [vmem:[#allocation3] sm:$0xff]
        %v1019 = vld [vmem:[#allocation3 + $0x8] sm:$0xff]
        %v1020 = vld [vmem:[#allocation3 + $0x10] sm:$0xff]
        %v1021 = vld [vmem:[#allocation3 + $0x18] sm:$0xff]
        %v1022 = vld [vmem:[#allocation3 + $0x20] sm:$0xff]
        %1024 = vset.pattern.permute.xlu0 0
        %1025 = vperm.xlu0 %1024, %v433
        %v1026 = vpop.permute.xlu0 %1025
        %v1028 = vmul.f32 %v1018, %v1026
        %v1029 = vmul.f32 %v1019, %v1026
        %v1030 = vmul.f32 %v1020, %v1026
        %v1031 = vmul.f32 %v1021, %v1026
        %v1032 = vmul.f32 %v1022, %v1026
        %1033 = vset.pattern.permute.xlu0 1
        %1034 = vperm.xlu0 %1033, %v433
        %v1035 = vpop.permute.xlu0 %1034
        %v1037 = vmul.f32 %v1018, %v1035
        %v1038 = vmul.f32 %v1019, %v1035
        %v1039 = vmul.f32 %v1020, %v1035
        %v1040 = vmul.f32 %v1021, %v1035
        %v1041 = vmul.f32 %v1022, %v1035
        %1047 = vrot.lane.b32.xlu0 %v1037, 127
        %v1048 = vpop.permute.xlu0 %1047
        %1049 = vrot.lane.b32.xlu0 %v1038, 127
        %v1050 = vpop.permute.xlu0 %1049
        %1051 = vrot.lane.b32.xlu0 %v1039, 127
        %v1052 = vpop.permute.xlu0 %1051
        %1053 = vrot.lane.b32.xlu0 %v1040, 127
        %v1054 = vpop.permute.xlu0 %1053
        %1055 = vrot.lane.b32.xlu0 %v1041, 127
        %v1056 = vpop.permute.xlu0 %1055
        %v1057 = vsel %vm507, %v1048, %v1050
        %v1058 = vsel %vm507, %v1050, %v1052
        %v1059 = vsel %vm507, %v1052, %v1054
        %v1060 = vsel %vm507, %v1054, %v1056
        %v1066 = vadd.f32 %v1028, %v1057
        %v1067 = vadd.f32 %v1029, %v1058
        %v1068 = vadd.f32 %v1030, %v1059
        %v1069 = vadd.f32 %v1031, %v1060
        %v1070 = vadd.f32 %v1032, %v1056
        %1071 = vset.pattern.permute.xlu0 2
        %1072 = vperm.xlu0 %1071, %v433
        %v1073 = vpop.permute.xlu0 %1072
        %v1075 = vmul.f32 %v1018, %v1073
        %v1076 = vmul.f32 %v1019, %v1073
        %v1077 = vmul.f32 %v1020, %v1073
        %v1078 = vmul.f32 %v1021, %v1073
        %v1079 = vmul.f32 %v1022, %v1073
        %1085 = vrot.lane.b32.xlu0 %v1075, 126
        %v1086 = vpop.permute.xlu0 %1085
        %1087 = vrot.lane.b32.xlu0 %v1076, 126
        %v1088 = vpop.permute.xlu0 %1087
        %1089 = vrot.lane.b32.xlu0 %v1077, 126
        %v1090 = vpop.permute.xlu0 %1089
        %1091 = vrot.lane.b32.xlu0 %v1078, 126
        %v1092 = vpop.permute.xlu0 %1091
        %1093 = vrot.lane.b32.xlu0 %v1079, 126
        %v1094 = vpop.permute.xlu0 %1093
        %v1095 = vsel %vm546, %v1086, %v1088
        %v1096 = vsel %vm546, %v1088, %v1090
        %v1097 = vsel %vm546, %v1090, %v1092
        %v1098 = vsel %vm546, %v1092, %v1094
        %v1104 = vadd.f32 %v1066, %v1095
        %v1105 = vadd.f32 %v1067, %v1096
        %v1106 = vadd.f32 %v1068, %v1097
        %v1107 = vadd.f32 %v1069, %v1098
        %v1108 = vadd.f32 %v1070, %v1094
        %1109 = vset.pattern.permute.xlu0 3
        %1110 = vperm.xlu0 %1109, %v433
        %v1111 = vpop.permute.xlu0 %1110
        %v1113 = vmul.f32 %v1018, %v1111
        %v1114 = vmul.f32 %v1019, %v1111
        %v1115 = vmul.f32 %v1020, %v1111
        %v1116 = vmul.f32 %v1021, %v1111
        %v1117 = vmul.f32 %v1022, %v1111
        %1123 = vrot.lane.b32.xlu0 %v1113, 108
        %v1124 = vpop.permute.xlu0 %1123
        %1125 = vrot.lane.b32.xlu0 %v1114, 108
        %v1126 = vpop.permute.xlu0 %1125
        %1127 = vrot.lane.b32.xlu0 %v1115, 108
        %v1128 = vpop.permute.xlu0 %1127
        %1129 = vrot.lane.b32.xlu0 %v1116, 108
        %v1130 = vpop.permute.xlu0 %1129
        %1131 = vrot.lane.b32.xlu0 %v1117, 108
        %v1132 = vpop.permute.xlu0 %1131
        %v1133 = vsel %vm585, %v1124, %v1126
        %v1134 = vsel %vm585, %v1126, %v1128
        %v1135 = vsel %vm585, %v1128, %v1130
        %v1136 = vsel %vm585, %v1130, %v1132
        %v1142 = vadd.f32 %v1104, %v1133
        %v1143 = vadd.f32 %v1105, %v1134
        %v1144 = vadd.f32 %v1106, %v1135
        %v1145 = vadd.f32 %v1107, %v1136
        %v1146 = vadd.f32 %v1108, %v1132
        %1147 = vset.pattern.permute.xlu0 4
        %1148 = vperm.xlu0 %1147, %v433
        %v1149 = vpop.permute.xlu0 %1148
        %v1151 = vmul.f32 %v1019, %v1149
        %v1152 = vmul.f32 %v1020, %v1149
        %v1153 = vmul.f32 %v1021, %v1149
        %v1154 = vmul.f32 %v1022, %v1149
        %1159 = vrot.lane.b32.xlu0 %v1151, 107
        %v1160 = vpop.permute.xlu0 %1159
        %1161 = vrot.lane.b32.xlu0 %v1152, 107
        %v1162 = vpop.permute.xlu0 %1161
        %1163 = vrot.lane.b32.xlu0 %v1153, 107
        %v1164 = vpop.permute.xlu0 %1163
        %1165 = vrot.lane.b32.xlu0 %v1154, 107
        %v1166 = vpop.permute.xlu0 %1165
        %v1167 = vsel %vm620, %v1160, %v1162
        %v1168 = vsel %vm620, %v1162, %v1164
        %v1169 = vsel %vm620, %v1164, %v1166
        %v1175 = vadd.f32 %v1142, %v1160
        %v1176 = vadd.f32 %v1143, %v1167
        %v1177 = vadd.f32 %v1144, %v1168
        %v1178 = vadd.f32 %v1145, %v1169
        %v1179 = vadd.f32 %v1146, %v1166
        %v1180 = vld [vmem:[#allocation3 + $0x8] sm:$0xff]
        %v1181 = vld [vmem:[#allocation3 + $0x10] sm:$0xff]
        %v1182 = vld [vmem:[#allocation3 + $0x18] sm:$0xff]
        %v1183 = vld [vmem:[#allocation3 + $0x20] sm:$0xff]
        %v1184 = vld [vmem:[#allocation3 + $0x28] sm:$0xff]
        %1185 = vset.pattern.permute.xlu0 5
        %1186 = vperm.xlu0 %1185, %v433
        %v1187 = vpop.permute.xlu0 %1186
        %v1189 = vmul.f32 %v1180, %v1187
        %v1190 = vmul.f32 %v1181, %v1187
        %v1191 = vmul.f32 %v1182, %v1187
        %v1192 = vmul.f32 %v1183, %v1187
        %v1193 = vmul.f32 %v1184, %v1187
        %1199 = vrot.lane.b32.xlu0 %v1189, 106
        %v1200 = vpop.permute.xlu0 %1199
        %1201 = vrot.lane.b32.xlu0 %v1190, 106
        %v1202 = vpop.permute.xlu0 %1201
        %1203 = vrot.lane.b32.xlu0 %v1191, 106
        %v1204 = vpop.permute.xlu0 %1203
        %1205 = vrot.lane.b32.xlu0 %v1192, 106
        %v1206 = vpop.permute.xlu0 %1205
        %1207 = vrot.lane.b32.xlu0 %v1193, 106
        %v1208 = vpop.permute.xlu0 %1207
        %v1209 = vsel %vm663, %v1200, %v1202
        %v1210 = vsel %vm663, %v1202, %v1204
        %v1211 = vsel %vm663, %v1204, %v1206
        %v1212 = vsel %vm663, %v1206, %v1208
        %v1218 = vadd.f32 %v1175, %v1200
        %v1219 = vadd.f32 %v1176, %v1209
        %v1220 = vadd.f32 %v1177, %v1210
        %v1221 = vadd.f32 %v1178, %v1211
        %v1222 = vadd.f32 %v1179, %v1212
        %1223 = vset.pattern.permute.xlu0 6
        %1224 = vperm.xlu0 %1223, %v433
        %v1225 = vpop.permute.xlu0 %1224
        %v1227 = vmul.f32 %v1180, %v1225
        %v1228 = vmul.f32 %v1181, %v1225
        %v1229 = vmul.f32 %v1182, %v1225
        %v1230 = vmul.f32 %v1183, %v1225
        %v1231 = vmul.f32 %v1184, %v1225
        %1237 = vrot.lane.b32.xlu0 %v1227, 88
        %v1238 = vpop.permute.xlu0 %1237
        %1239 = vrot.lane.b32.xlu0 %v1228, 88
        %v1240 = vpop.permute.xlu0 %1239
        %1241 = vrot.lane.b32.xlu0 %v1229, 88
        %v1242 = vpop.permute.xlu0 %1241
        %1243 = vrot.lane.b32.xlu0 %v1230, 88
        %v1244 = vpop.permute.xlu0 %1243
        %1245 = vrot.lane.b32.xlu0 %v1231, 88
        %v1246 = vpop.permute.xlu0 %1245
        %v1247 = vsel %vm702, %v1238, %v1240
        %v1248 = vsel %vm702, %v1240, %v1242
        %v1249 = vsel %vm702, %v1242, %v1244
        %v1250 = vsel %vm702, %v1244, %v1246
        %v1256 = vadd.f32 %v1218, %v1238
        %v1257 = vadd.f32 %v1219, %v1247
        %v1258 = vadd.f32 %v1220, %v1248
        %v1259 = vadd.f32 %v1221, %v1249
        %v1260 = vadd.f32 %v1222, %v1250
        %1261 = vset.pattern.permute.xlu0 7
        %1262 = vperm.xlu0 %1261, %v433
        %v1263 = vpop.permute.xlu0 %1262
        %v1265 = vmul.f32 %v1180, %v1263
        %v1266 = vmul.f32 %v1181, %v1263
        %v1267 = vmul.f32 %v1182, %v1263
        %v1268 = vmul.f32 %v1183, %v1263
        %v1269 = vmul.f32 %v1184, %v1263
        %1275 = vrot.lane.b32.xlu0 %v1265, 87
        %v1276 = vpop.permute.xlu0 %1275
        %1277 = vrot.lane.b32.xlu0 %v1266, 87
        %v1278 = vpop.permute.xlu0 %1277
        %1279 = vrot.lane.b32.xlu0 %v1267, 87
        %v1280 = vpop.permute.xlu0 %1279
        %1281 = vrot.lane.b32.xlu0 %v1268, 87
        %v1282 = vpop.permute.xlu0 %1281
        %1283 = vrot.lane.b32.xlu0 %v1269, 87
        %v1284 = vpop.permute.xlu0 %1283
        %v1285 = vsel %vm741, %v1276, %v1278
        %v1286 = vsel %vm741, %v1278, %v1280
        %v1287 = vsel %vm741, %v1280, %v1282
        %v1288 = vsel %vm741, %v1282, %v1284
        %v1294 = vadd.f32 %v1256, %v1276
        %v1295 = vadd.f32 %v1257, %v1285
        %v1296 = vadd.f32 %v1258, %v1286
        %v1297 = vadd.f32 %v1259, %v1287
        %v1298 = vadd.f32 %v1260, %v1288
        %1299 = vset.pattern.permute.xlu0 8
        %1300 = vperm.xlu0 %1299, %v433
        %v1301 = vpop.permute.xlu0 %1300
        %v1303 = vmul.f32 %v1180, %v1301
        %v1304 = vmul.f32 %v1181, %v1301
        %v1305 = vmul.f32 %v1182, %v1301
        %v1306 = vmul.f32 %v1183, %v1301
        %v1307 = vmul.f32 %v1184, %v1301
        %1313 = vrot.lane.b32.xlu0 %v1303, 86
        %v1314 = vpop.permute.xlu0 %1313
        %1315 = vrot.lane.b32.xlu0 %v1304, 86
        %v1316 = vpop.permute.xlu0 %1315
        %1317 = vrot.lane.b32.xlu0 %v1305, 86
        %v1318 = vpop.permute.xlu0 %1317
        %1319 = vrot.lane.b32.xlu0 %v1306, 86
        %v1320 = vpop.permute.xlu0 %1319
        %1321 = vrot.lane.b32.xlu0 %v1307, 86
        %v1322 = vpop.permute.xlu0 %1321
        %v1323 = vsel %vm780, %v1314, %v1316
        %v1324 = vsel %vm780, %v1316, %v1318
        %v1325 = vsel %vm780, %v1318, %v1320
        %v1326 = vsel %vm780, %v1320, %v1322
        %v1332 = vadd.f32 %v1294, %v1314
        %v1333 = vadd.f32 %v1295, %v1323
        %v1334 = vadd.f32 %v1296, %v1324
        %v1335 = vadd.f32 %v1297, %v1325
        %v1336 = vadd.f32 %v1298, %v1326
        %1338 = vset.pattern.permute.xlu0 0
        %1339 = vperm.xlu0 %1338, %v436
        %v1340 = vpop.permute.xlu0 %1339
        %v1342 = vadd.f32 %v1332, %v1340
        %v1343 = vadd.f32 %v1333, %v1340
        %v1344 = vadd.f32 %v1334, %v1340
        %v1345 = vadd.f32 %v1335, %v1340
        %v1346 = vadd.f32 %v1336, %v1340
        %v1347 = vmax.f32 %v1342, 0.0
        %v1348 = vmax.f32 %v1343, 0.0
        %v1349 = vmax.f32 %v1344, 0.0
        %v1350 = vmax.f32 %v1345, 0.0
        %v1351 = vmax.f32 %v1346, 0.0
        %1353 = vset.pattern.permute.xlu0 0
        %1354 = vperm.xlu0 %1353, %v437
        %v1355 = vpop.permute.xlu0 %1354
        %1362 = vrot.lane.b32.xlu0 %v1347, 21
        %v1363 = vpop.permute.xlu0 %1362
        %1364 = vrot.lane.b32.xlu0 %v1348, 21
        %v1365 = vpop.permute.xlu0 %1364
        %1366 = vrot.lane.b32.xlu0 %v1349, 21
        %v1367 = vpop.permute.xlu0 %1366
        %1368 = vrot.lane.b32.xlu0 %v1350, 21
        %v1369 = vpop.permute.xlu0 %1368
        %1370 = vrot.lane.b32.xlu0 %v1351, 21
        %v1371 = vpop.permute.xlu0 %1370
        %v1372 = vsel %vm830, %v1363, %v1365
        %v1373 = vsel %vm830, %v1365, %v1367
        %v1374 = vsel %vm830, %v1367, %v1369
        %v1375 = vsel %vm830, %v1369, %v1371
        %v1381 = vsel %vm839, %v439, 0
        %1383 = vmatprep.subr.mxu0 0.0
        %1384 = vmatpush1.msra.mxu0 0.0
        %1385 = vmatprep.subr.mxu0 0.0
        %1386 = vmatpush1.msra.mxu0 0.0
        %1387 = vmatprep.subr.mxu0 0.0
        %1388 = vmatpush1.msra.mxu0 0.0
        %1389 = vmatprep.subr.mxu0 0.0
        %1390 = vmatpush1.msra.mxu0 0.0
        %1391 = vmatprep.subr.mxu0 0.0
        %1392 = vmatpush1.msra.mxu0 0.0
        %1393 = vmatprep.subr.mxu0 0.0
        %1394 = vmatpush1.msra.mxu0 0.0
        %1395 = vmatprep.subr.mxu0 0.0
        %1396 = vmatpush1.msra.mxu0 0.0
        %1397 = vmatprep.subr.mxu0 0.0
        %1398 = vmatpush1.msra.mxu0 0.0
        %1399 = vmatprep.subr.mxu0 0.0
        %1400 = vmatpush1.msra.mxu0 0.0
        %1401 = vmatprep.subr.mxu0 0.0
        %1402 = vmatpush1.msra.mxu0 0.0
        %1403 = vmatprep.subr.mxu0 0.0
        %1404 = vmatpush1.msra.mxu0 0.0
        %1405 = vmatprep.subr.mxu0 0.0
        %1406 = vmatpush1.msra.mxu0 0.0
        %1407 = vmatprep.subr.mxu0 0.0
        %1408 = vmatpush1.msra.mxu0 0.0
        %1409 = vmatprep.subr.mxu0 0.0
        %1410 = vmatpush1.msra.mxu0 0.0
        %1411 = vmatprep.subr.mxu0 0.0
        %1412 = vmatpush1.msra.mxu0 0.0
        %1413 = vmatprep.subr.mxu0 %v1373
        %1414 = vmatpush1.msra.mxu0 %v1372
        %1415 = vmatprep.subr.mxu0 0.0
        %1416 = vmatpush2.msra.mxu0 0.0
        %1417 = vmatprep.subr.mxu0 0.0
        %1418 = vmatpush2.msra.mxu0 0.0
        %1419 = vmatprep.subr.mxu0 0.0
        %1420 = vmatpush2.msra.mxu0 0.0
        %1421 = vmatprep.subr.mxu0 0.0
        %1422 = vmatpush2.msra.mxu0 0.0
        %1423 = vmatprep.subr.mxu0 0.0
        %1424 = vmatpush2.msra.mxu0 0.0
        %1425 = vmatprep.subr.mxu0 0.0
        %1426 = vmatpush2.msra.mxu0 0.0
        %1427 = vmatprep.subr.mxu0 0.0
        %1428 = vmatpush2.msra.mxu0 0.0
        %1429 = vmatprep.subr.mxu0 0.0
        %1430 = vmatpush2.msra.mxu0 0.0
        %1431 = vmatprep.subr.mxu0 0.0
        %1432 = vmatpush2.msra.mxu0 0.0
        %1433 = vmatprep.subr.mxu0 0.0
        %1434 = vmatpush2.msra.mxu0 0.0
        %1435 = vmatprep.subr.mxu0 0.0
        %1436 = vmatpush2.msra.mxu0 0.0
        %1437 = vmatprep.subr.mxu0 0.0
        %1438 = vmatpush2.msra.mxu0 0.0
        %1439 = vmatprep.subr.mxu0 0.0
        %1440 = vmatpush2.msra.mxu0 0.0
        %1441 = vmatprep.subr.mxu0 0.0
        %1442 = vmatpush2.msra.mxu0 0.0
        %1443 = vmatprep.subr.mxu0 0.0
        %1444 = vmatpush2.msra.mxu0 0.0
        %1445 = vmatprep.subr.mxu0 0.0
        %1446 = vmatpush2.msra.mxu0 0.0
        %1447 = vmatprep.mubr.f32.mxu0 0.0
        %1448 = vmatmul.mubr.f32.gmra.mxu0 %v1381
        %v1449 = vpop.f32.mrf.mxu0
        %v1450 = vadd.f32 %v1355, %v1449
        %v1451 = vpop.f32.mrf.mxu0
        %v1452 = vadd.f32 %v1355, %v1451
        %1453 = vdwg.mxu0
        %1454 = vmatprep.subr.mxu0 0.0
        %1455 = vmatpush1.msra.mxu0 0.0
        %1456 = vmatprep.subr.mxu0 0.0
        %1457 = vmatpush1.msra.mxu0 0.0
        %1458 = vmatprep.subr.mxu0 0.0
        %1459 = vmatpush1.msra.mxu0 0.0
        %1460 = vmatprep.subr.mxu0 0.0
        %1461 = vmatpush1.msra.mxu0 0.0
        %1462 = vmatprep.subr.mxu0 0.0
        %1463 = vmatpush1.msra.mxu0 0.0
        %1464 = vmatprep.subr.mxu0 0.0
        %1465 = vmatpush1.msra.mxu0 0.0
        %1466 = vmatprep.subr.mxu0 0.0
        %1467 = vmatpush1.msra.mxu0 0.0
        %1468 = vmatprep.subr.mxu0 0.0
        %1469 = vmatpush1.msra.mxu0 0.0
        %1470 = vmatprep.subr.mxu0 0.0
        %1471 = vmatpush1.msra.mxu0 0.0
        %1472 = vmatprep.subr.mxu0 0.0
        %1473 = vmatpush1.msra.mxu0 0.0
        %1474 = vmatprep.subr.mxu0 0.0
        %1475 = vmatpush1.msra.mxu0 0.0
        %1476 = vmatprep.subr.mxu0 0.0
        %1477 = vmatpush1.msra.mxu0 0.0
        %1478 = vmatprep.subr.mxu0 0.0
        %1479 = vmatpush1.msra.mxu0 0.0
        %1480 = vmatprep.subr.mxu0 0.0
        %1481 = vmatpush1.msra.mxu0 0.0
        %1482 = vmatprep.subr.mxu0 0.0
        %1483 = vmatpush1.msra.mxu0 0.0
        %1484 = vmatprep.subr.mxu0 %v1375
        %1485 = vmatpush1.msra.mxu0 %v1374
        %1486 = vmatprep.subr.mxu0 0.0
        %1487 = vmatpush2.msra.mxu0 0.0
        %1488 = vmatprep.subr.mxu0 0.0
        %1489 = vmatpush2.msra.mxu0 0.0
        %1490 = vmatprep.subr.mxu0 0.0
        %1491 = vmatpush2.msra.mxu0 0.0
        %1492 = vmatprep.subr.mxu0 0.0
        %1493 = vmatpush2.msra.mxu0 0.0
        %1494 = vmatprep.subr.mxu0 0.0
        %1495 = vmatpush2.msra.mxu0 0.0
        %1496 = vmatprep.subr.mxu0 0.0
        %1497 = vmatpush2.msra.mxu0 0.0
        %1498 = vmatprep.subr.mxu0 0.0
        %1499 = vmatpush2.msra.mxu0 0.0
        %1500 = vmatprep.subr.mxu0 0.0
        %1501 = vmatpush2.msra.mxu0 0.0
        %1502 = vmatprep.subr.mxu0 0.0
        %1503 = vmatpush2.msra.mxu0 0.0
        %1504 = vmatprep.subr.mxu0 0.0
        %1505 = vmatpush2.msra.mxu0 0.0
        %1506 = vmatprep.subr.mxu0 0.0
        %1507 = vmatpush2.msra.mxu0 0.0
        %1508 = vmatprep.subr.mxu0 0.0
        %1509 = vmatpush2.msra.mxu0 0.0
        %1510 = vmatprep.subr.mxu0 0.0
        %1511 = vmatpush2.msra.mxu0 0.0
        %1512 = vmatprep.subr.mxu0 0.0
        %1513 = vmatpush2.msra.mxu0 0.0
        %1514 = vmatprep.subr.mxu0 0.0
        %1515 = vmatpush2.msra.mxu0 0.0
        %1516 = vmatprep.subr.mxu0 0.0
        %1517 = vmatpush2.msra.mxu0 0.0
        %1518 = vmatprep.mubr.f32.mxu0 0.0
        %1519 = vmatmul.mubr.f32.gmra.mxu0 %v1381
        %v1520 = vpop.f32.mrf.mxu0
        %v1521 = vadd.f32 %v1355, %v1520
        %v1522 = vpop.f32.mrf.mxu0
        %v1523 = vadd.f32 %v1355, %v1522
        %1524 = vdwg.mxu0
        %v1525 = vmax.f32 %v1450, 0.0
        %v1526 = vmax.f32 %v1452, 0.0
        %v1527 = vmax.f32 %v1521, 0.0
        %v1528 = vmax.f32 %v1523, 0.0
        %1530 = vset.pattern.permute.xlu0 0
        %1531 = vperm.xlu0 %1530, %v441
        %v1532 = vpop.permute.xlu0 %1531
        %v1535 = vsel %vm839, %v440, 0
        %1537 = vmatprep.subr.mxu0 0.0
        %1538 = vmatpush1.msra.mxu0 0.0
        %1539 = vmatprep.subr.mxu0 0.0
        %1540 = vmatpush1.msra.mxu0 0.0
        %1541 = vmatprep.subr.mxu0 0.0
        %1542 = vmatpush1.msra.mxu0 0.0
        %1543 = vmatprep.subr.mxu0 0.0
        %1544 = vmatpush1.msra.mxu0 0.0
        %1545 = vmatprep.subr.mxu0 0.0
        %1546 = vmatpush1.msra.mxu0 0.0
        %1547 = vmatprep.subr.mxu0 0.0
        %1548 = vmatpush1.msra.mxu0 0.0
        %1549 = vmatprep.subr.mxu0 0.0
        %1550 = vmatpush1.msra.mxu0 0.0
        %1551 = vmatprep.subr.mxu0 0.0
        %1552 = vmatpush1.msra.mxu0 0.0
        %1553 = vmatprep.subr.mxu0 0.0
        %1554 = vmatpush1.msra.mxu0 0.0
        %1555 = vmatprep.subr.mxu0 0.0
        %1556 = vmatpush1.msra.mxu0 0.0
        %1557 = vmatprep.subr.mxu0 0.0
        %1558 = vmatpush1.msra.mxu0 0.0
        %1559 = vmatprep.subr.mxu0 0.0
        %1560 = vmatpush1.msra.mxu0 0.0
        %1561 = vmatprep.subr.mxu0 0.0
        %1562 = vmatpush1.msra.mxu0 0.0
        %1563 = vmatprep.subr.mxu0 0.0
        %1564 = vmatpush1.msra.mxu0 0.0
        %1565 = vmatprep.subr.mxu0 0.0
        %1566 = vmatpush1.msra.mxu0 0.0
        %1567 = vmatprep.subr.mxu0 %v1526
        %1568 = vmatpush1.msra.mxu0 %v1525
        %1569 = vmatprep.subr.mxu0 0.0
        %1570 = vmatpush2.msra.mxu0 0.0
        %1571 = vmatprep.subr.mxu0 0.0
        %1572 = vmatpush2.msra.mxu0 0.0
        %1573 = vmatprep.subr.mxu0 0.0
        %1574 = vmatpush2.msra.mxu0 0.0
        %1575 = vmatprep.subr.mxu0 0.0
        %1576 = vmatpush2.msra.mxu0 0.0
        %1577 = vmatprep.subr.mxu0 0.0
        %1578 = vmatpush2.msra.mxu0 0.0
        %1579 = vmatprep.subr.mxu0 0.0
        %1580 = vmatpush2.msra.mxu0 0.0
        %1581 = vmatprep.subr.mxu0 0.0
        %1582 = vmatpush2.msra.mxu0 0.0
        %1583 = vmatprep.subr.mxu0 0.0
        %1584 = vmatpush2.msra.mxu0 0.0
        %1585 = vmatprep.subr.mxu0 0.0
        %1586 = vmatpush2.msra.mxu0 0.0
        %1587 = vmatprep.subr.mxu0 0.0
        %1588 = vmatpush2.msra.mxu0 0.0
        %1589 = vmatprep.subr.mxu0 0.0
        %1590 = vmatpush2.msra.mxu0 0.0
        %1591 = vmatprep.subr.mxu0 0.0
        %1592 = vmatpush2.msra.mxu0 0.0
        %1593 = vmatprep.subr.mxu0 0.0
        %1594 = vmatpush2.msra.mxu0 0.0
        %1595 = vmatprep.subr.mxu0 0.0
        %1596 = vmatpush2.msra.mxu0 0.0
        %1597 = vmatprep.subr.mxu0 0.0
        %1598 = vmatpush2.msra.mxu0 0.0
        %1599 = vmatprep.subr.mxu0 0.0
        %1600 = vmatpush2.msra.mxu0 0.0
        %1601 = vmatprep.mubr.f32.mxu0 0.0
        %1602 = vmatmul.mubr.f32.gmra.mxu0 %v1535
        %v1603 = vpop.f32.mrf.mxu0
        %v1604 = vadd.f32 %v1532, %v1603
        %v1605 = vpop.f32.mrf.mxu0
        %v1606 = vadd.f32 %v1532, %v1605
        %1607 = vdwg.mxu0
        %1608 = vmatprep.subr.mxu0 0.0
        %1609 = vmatpush1.msra.mxu0 0.0
        %1610 = vmatprep.subr.mxu0 0.0
        %1611 = vmatpush1.msra.mxu0 0.0
        %1612 = vmatprep.subr.mxu0 0.0
        %1613 = vmatpush1.msra.mxu0 0.0
        %1614 = vmatprep.subr.mxu0 0.0
        %1615 = vmatpush1.msra.mxu0 0.0
        %1616 = vmatprep.subr.mxu0 0.0
        %1617 = vmatpush1.msra.mxu0 0.0
        %1618 = vmatprep.subr.mxu0 0.0
        %1619 = vmatpush1.msra.mxu0 0.0
        %1620 = vmatprep.subr.mxu0 0.0
        %1621 = vmatpush1.msra.mxu0 0.0
        %1622 = vmatprep.subr.mxu0 0.0
        %1623 = vmatpush1.msra.mxu0 0.0
        %1624 = vmatprep.subr.mxu0 0.0
        %1625 = vmatpush1.msra.mxu0 0.0
        %1626 = vmatprep.subr.mxu0 0.0
        %1627 = vmatpush1.msra.mxu0 0.0
        %1628 = vmatprep.subr.mxu0 0.0
        %1629 = vmatpush1.msra.mxu0 0.0
        %1630 = vmatprep.subr.mxu0 0.0
        %1631 = vmatpush1.msra.mxu0 0.0
        %1632 = vmatprep.subr.mxu0 0.0
        %1633 = vmatpush1.msra.mxu0 0.0
        %1634 = vmatprep.subr.mxu0 0.0
        %1635 = vmatpush1.msra.mxu0 0.0
        %1636 = vmatprep.subr.mxu0 0.0
        %1637 = vmatpush1.msra.mxu0 0.0
        %1638 = vmatprep.subr.mxu0 %v1528
        %1639 = vmatpush1.msra.mxu0 %v1527
        %1640 = vmatprep.subr.mxu0 0.0
        %1641 = vmatpush2.msra.mxu0 0.0
        %1642 = vmatprep.subr.mxu0 0.0
        %1643 = vmatpush2.msra.mxu0 0.0
        %1644 = vmatprep.subr.mxu0 0.0
        %1645 = vmatpush2.msra.mxu0 0.0
        %1646 = vmatprep.subr.mxu0 0.0
        %1647 = vmatpush2.msra.mxu0 0.0
        %1648 = vmatprep.subr.mxu0 0.0
        %1649 = vmatpush2.msra.mxu0 0.0
        %1650 = vmatprep.subr.mxu0 0.0
        %1651 = vmatpush2.msra.mxu0 0.0
        %1652 = vmatprep.subr.mxu0 0.0
        %1653 = vmatpush2.msra.mxu0 0.0
        %1654 = vmatprep.subr.mxu0 0.0
        %1655 = vmatpush2.msra.mxu0 0.0
        %1656 = vmatprep.subr.mxu0 0.0
        %1657 = vmatpush2.msra.mxu0 0.0
        %1658 = vmatprep.subr.mxu0 0.0
        %1659 = vmatpush2.msra.mxu0 0.0
        %1660 = vmatprep.subr.mxu0 0.0
        %1661 = vmatpush2.msra.mxu0 0.0
        %1662 = vmatprep.subr.mxu0 0.0
        %1663 = vmatpush2.msra.mxu0 0.0
        %1664 = vmatprep.subr.mxu0 0.0
        %1665 = vmatpush2.msra.mxu0 0.0
        %1666 = vmatprep.subr.mxu0 0.0
        %1667 = vmatpush2.msra.mxu0 0.0
        %1668 = vmatprep.subr.mxu0 0.0
        %1669 = vmatpush2.msra.mxu0 0.0
        %1670 = vmatprep.subr.mxu0 0.0
        %1671 = vmatpush2.msra.mxu0 0.0
        %1672 = vmatprep.mubr.f32.mxu0 0.0
        %1673 = vmatmul.mubr.f32.gmra.mxu0 %v1535
        %v1674 = vpop.f32.mrf.mxu0
        %v1675 = vadd.f32 %v1532, %v1674
        %v1676 = vpop.f32.mrf.mxu0
        %v1677 = vadd.f32 %v1532, %v1676
        %1678 = vdwg.mxu0
        %1679 = vst [vmem:[%s431] sm:$0x3f] %v1604
        %1680 = vst [vmem:[%s431 + $0x8] sm:$0x3f] %v1606
        %1681 = vst [vmem:[%s431 + $0x10] sm:$0x3f] %v1675
        %1682 = vst [vmem:[%s431 + $0x18] sm:$0x3f] %v1677
        %p1683 = scmp.lt.s32.totalorder %s26, 1
        %s1684 = scalar_select %p1683, %s26, 1
        %s1685 = smul.addr %s1684, 4
        %s1686 = smul.addr %s1685, 8
        %s1687 = scalar_lea.vmem %s12, %s1686
        // Predicated region
        $region77: #{tpu_custom_call.1} parent=67 // pred_check
          %p1688 = pneg %p301
        $region78: #{tpu_custom_call.1} parent=67 // pred_check_branch
          %1690 = sbr.rel (%p1688) target = $region80
        $region79: #{tpu_custom_call.1} parent=67 // pred_region
          _
        $region80: #{tpu_custom_call.1} parent=67 // pred_fallthru
          _
      $region68: #{tpu_custom_call.1} parent=5 // pred_fallthru
        _
      %p1691 = scmp.le.s32.totalorder 2, %s21
      // Predicated region
      $region81: #{tpu_custom_call.1} parent=5 // pred_check
        %p1692 = pneg %p1691
      $region82: #{tpu_custom_call.1} parent=5 // pred_check_branch
        %1694 = sbr.rel (%p1692) target = $region84
      $region83: #{tpu_custom_call.1} parent=5 // pred_region
        %s1695 = ssub.s32 %s21, 2
        // Predicated region
        $region85: #{tpu_custom_call.1} parent=83 // pred_check
          %p1696 = pneg %p307
        $region86: #{tpu_custom_call.1} parent=83 // pred_check_branch
          %1698 = sbr.rel (%p1696) target = $region88
        $region87: #{tpu_custom_call.1} parent=83 // pred_region
          %p1699 = scmp.lt.s32.totalorder %s27, 1
          %s1700 = scalar_select %p1699, %s27, 1
          %s1701 = smul.addr %s1700, 4
          %s1702 = smul.addr %s1701, 8
          %s1703 = scalar_lea.vmem %s12, %s1702
        $region88: #{tpu_custom_call.1} parent=83 // pred_fallthru
          _
      $region84: #{tpu_custom_call.1} parent=5 // pred_fallthru
        _
    $region6: #{tpu_custom_call.1} parent=1 // loop_footer
      %s25 = sadd.s32 1, %s21
    $region7: #{tpu_custom_call.1} parent=1 // loop_footer_branch
      %20 = sbr.rel target = $region3
    $region8: #{tpu_custom_call.1} parent=1 // loop_exit
      _
    %1704 = vsyncpa [#allocation5], 1
    %s1705 = scalar_lea.sflag [#allocation5], 1
    %1706 = vsyncpa %s1705, 1

</llo_original>
